<compile_context>
chip_gen: v5e
topology: v5e:2x2
jax: 0.10.0
libtpu: 0.0.40
codegen_flags: <defaults>
</compile_context>

<pallas_src>
import functools

import jax
import jax.numpy as jnp
from jax.experimental import pallas as pl
from jax.experimental.pallas import tpu as pltpu

LEAKY_SLOPE = 0.05
LANE = 128


def _round_up(x, m):
    return (x + m - 1) // m * m


# ----------------------------------------------------------------------------
# Kernel
# ----------------------------------------------------------------------------
def face_mlp_kernel(n_classes,
                    x_ref,
                    w1_ref, b1_ref,
                    w2_ref, b2_ref,
                    w3_ref, b3_ref,
                    w4_ref, b4_ref,
                    w5_ref, b5_ref,
                    hidden_ref, logits_ref, probs_ref):
    """One batch tile of the fused MLP. Weights stay resident across the grid."""
    dot_dtype = w1_ref.dtype  # bf16 (or f32 if use_bf16=False)

    def linear(h, w_ref, b_ref):
        # cast only at the MXU boundary; accumulate + bias in f32
        return jnp.dot(h.astype(dot_dtype), w_ref[...],
                       preferred_element_type=jnp.float32) + b_ref[...]

    def leaky_relu(h):
        return jnp.where(h > 0, h, LEAKY_SLOPE * h)

    x = x_ref[...]                                     # (TB, 128) bf16

    # bf16 cast directly after each nonlinearity: only consumer is the bf16
    # cast at the next matmul, so numerics are identical but live temporaries
    # occupy half the vregs / spill space.
    h = leaky_relu(linear(x, w1_ref, b1_ref)).astype(dot_dtype)   # (TB, 256)
    h = leaky_relu(linear(h, w2_ref, b2_ref)).astype(dot_dtype)   # (TB, 384)
    h = jnp.tanh(linear(h, w3_ref, b3_ref)).astype(dot_dtype)     # (TB, 512)

    hidden = linear(h, w4_ref, b4_ref)                 # (TB, H_pad) f32
    logits = linear(hidden, w5_ref, b5_ref)            # (TB, C_pad) f32

    hidden_ref[...] = hidden.astype(hidden_ref.dtype)
    logits_ref[...] = logits.astype(logits_ref.dtype)

    # masked softmax over the (padded) class axis -- exact normalization
    col = jax.lax.broadcasted_iota(jnp.int32, logits.shape, 1)
    valid = col < n_classes
    masked = jnp.where(valid, logits, -1e30)
    m = jnp.max(masked, axis=1, keepdims=True)
    e = jnp.where(valid, jnp.exp(masked - m), 0.0)
    s = jnp.sum(e, axis=1, keepdims=True)
    probs_ref[...] = (e / s).astype(probs_ref.dtype)


# ----------------------------------------------------------------------------
# Parameter prep: PyTorch-Linear-style init + padding / dtype for the kernel
# ----------------------------------------------------------------------------
def init_params(key, dim_hidden, n_classes):
    """Deterministic PyTorch-Linear-style init (uniform(-1/sqrt(fan_in), +)).

    Weights stored as (in_features, out_features), biases as (1, out_features).
    """
    dims = [(128, 256), (256, 350), (350, 512),
            (512, dim_hidden), (dim_hidden, n_classes)]
    params = {}
    keys = jax.random.split(key, 2 * len(dims))
    for i, (fin, fout) in enumerate(dims):
        bound = 1.0 / jnp.sqrt(jnp.float32(fin))
        params[f"w{i + 1}"] = jax.random.uniform(
            keys[2 * i], (fin, fout), jnp.float32, -bound, bound)
        params[f"b{i + 1}"] = jax.random.uniform(
            keys[2 * i + 1], (1, fout), jnp.float32, -bound, bound)
    return params


def _pad2(a, shape):
    out = jnp.zeros(shape, a.dtype)
    return out.at[: a.shape[0], : a.shape[1]].set(a)


def _prepare_params(params, compute_dtype):
    """Zero-pad ragged dims to lane multiples and cast weights to compute dtype."""
    dim_hidden = params["w4"].shape[1]
    n_classes = params["w5"].shape[1]
    d2_pad = _round_up(350, LANE)            # 384 (optimal for all MXU widths)
    h_pad = _round_up(dim_hidden, LANE)
    c_pad = _round_up(n_classes, LANE)

    p = {
        "w1": params["w1"].astype(compute_dtype),
        "b1": params["b1"],
        "w2": _pad2(params["w2"], (256, d2_pad)).astype(compute_dtype),
        "b2": _pad2(params["b2"], (1, d2_pad)),
        "w3": _pad2(params["w3"], (d2_pad, 512)).astype(compute_dtype),
        "b3": params["b3"],
        "w4": _pad2(params["w4"], (512, h_pad)).astype(compute_dtype),
        "b4": _pad2(params["b4"], (1, h_pad)),
        "w5": _pad2(params["w5"], (h_pad, c_pad)).astype(compute_dtype),
        "b5": _pad2(params["b5"], (1, c_pad)),
    }
    return p, h_pad, c_pad


# ----------------------------------------------------------------------------
# Wrapper
# ----------------------------------------------------------------------------
def face_network_forward(x, params, *, tile_b=512, use_bf16=True,
                         out_dtype=jnp.float32):
    """out_dtype=jnp.bfloat16 halves output writeback bytes (useful on v6e,
    which sits closest to the HBM roofline); default f32 for exact parity."""
    B = x.shape[0]
    dim_hidden = params["w4"].shape[1]
    n_classes = params["w5"].shape[1]
    compute_dtype = jnp.bfloat16 if use_bf16 else jnp.float32

    p, h_pad, c_pad = _prepare_params(params, compute_dtype)

    weight_order = ("w1", "b1", "w2", "b2", "w3", "b3", "w4", "b4", "w5", "b5")
    weight_bytes = sum(int(p[k].size) * p[k].dtype.itemsize for k in weight_order)
    in_bytes = jnp.dtype(compute_dtype).itemsize
    out_bytes = jnp.dtype(out_dtype).itemsize

    # --- batch tile selection -------------------------------------------------
    # (a) at least 2 grid steps when B allows, so both v7x TensorCores get
    #     batch tiles under dimension_semantics=("parallel",);
    # (b) TB bounded by an explicit VMEM budget (covers v5e 16 MiB scoped
    #     default and v7x's 64 MiB physical VMEM).
    tb = min(tile_b, _round_up(max(1, (B + 1) // 2), 8))

    vmem_budget = 24 * 1024 * 1024
    per_row = (2 * 128 * in_bytes                        # double-buffered x block
               + 2 * (h_pad + 2 * c_pad) * out_bytes     # double-buffered outputs
               + (256 + 384 + 512 + h_pad + c_pad) * 4)  # f32 temp headroom
    avail = max(vmem_budget - 2 * weight_bytes, 8 * per_row)
    tb_fit = max(8, min(avail // per_row, tile_b) // 8 * 8)
    TB = max(8, min(tb, tb_fit))

    B_pad = _round_up(B, TB)
    x = x.astype(compute_dtype)                          # bf16 input DMA
    if B_pad != B:
        x = jnp.pad(x, ((0, B_pad - B), (0, 0)))
    grid = (B_pad // TB,)

    # explicit scoped-VMEM request so the compiler keeps the 2-deep pipeline
    vmem_need = 2 * weight_bytes + TB * per_row + (1 << 20)
    vmem_limit = int(min(max(vmem_need, 16 << 20), 32 << 20))

    def batch_spec(feat):
        return pl.BlockSpec((TB, feat), lambda i: (i, 0))

    def const_spec(a):
        return pl.BlockSpec(a.shape, lambda i: (0, 0))   # resident across steps

    in_specs = [batch_spec(128)] + [const_spec(p[k]) for k in weight_order]
    out_specs = (batch_spec(h_pad), batch_spec(c_pad), batch_spec(c_pad))

    out_shape = (
        jax.ShapeDtypeStruct((B_pad, h_pad), out_dtype),   # hidden_out
        jax.ShapeDtypeStruct((B_pad, c_pad), out_dtype),   # logits
        jax.ShapeDtypeStruct((B_pad, c_pad), out_dtype),   # softmax(logits)
    )

    # advisory cost hint for XLA
    flops = 2 * B_pad * (128 * 256 + 256 * 384 + 384 * 512
                         + 512 * h_pad + h_pad * c_pad)
    transcendentals = B_pad * (512 + c_pad)                # tanh + exp
    bytes_accessed = (B_pad * (128 * in_bytes + (h_pad + 2 * c_pad) * out_bytes)
                      + weight_bytes)

    kernel = functools.partial(face_mlp_kernel, n_classes)

    hidden, logits, probs = pl.pallas_call(
        kernel,
        out_shape=out_shape,
        grid=grid,
        in_specs=in_specs,
        out_specs=out_specs,
        compiler_params=pltpu.CompilerParams(
            dimension_semantics=("parallel",),
            vmem_limit_bytes=vmem_limit),
        cost_estimate=pl.CostEstimate(
            flops=int(flops),
            transcendentals=int(transcendentals),
            bytes_accessed=int(bytes_accessed)),
    )(x, *[p[k] for k in weight_order])

    # slice back to true batch / feature widths
    return (hidden[:B, :dim_hidden],
            logits[:B, :n_classes],
            probs[:B, :n_classes])


# ----------------------------------------------------------------------------
# Pure-JAX reference (mirrors the kernel's bf16-at-dot / f32-accumulate numerics)
# ----------------------------------------------------------------------------
def _reference_forward(x, p, use_bf16=True):
    cd = jnp.bfloat16 if use_bf16 else jnp.float32

    def dot(h, w):
        return jnp.dot(h.astype(cd), w.astype(cd),
                       preferred_element_type=jnp.float32)

    def lrelu(h):
        return jnp.where(h > 0, h, LEAKY_SLOPE * h)

    h = x.astype(cd)
    h = lrelu(dot(h, p["w1"]) + p["b1"]).astype(cd)
    h = lrelu(dot(h, p["w2"]) + p["b2"]).astype(cd)
    h = jnp.tanh(dot(h, p["w3"]) + p["b3"]).astype(cd)
    hidden = dot(h, p["w4"]) + p["b4"]
    logits = dot(hidden, p["w5"]) + p["b5"]
    probs = jax.nn.softmax(logits, axis=1)
    return hidden, logits, probs


if __name__ == "__main__":
    key = jax.random.PRNGKey(0)
    k_params, k_x = jax.random.split(key)

    B, dim_hidden, n_classes = 16, 64, 10
    params = init_params(k_params, dim_hidden, n_classes)
    x = jax.random.normal(k_x, (B, 128), jnp.float32)

    hidden_out, logits, probs = face_network_forward(x, params)
    jax.block_until_ready((hidden_out, logits, probs))

    assert hidden_out.shape == (B, dim_hidden)
    assert logits.shape == (B, n_classes)
    assert probs.shape == (B, n_classes)

    # sanity check vs pure-JAX reference (same bf16-at-dot numerics)
    h_ref, l_ref, p_ref = _reference_forward(x, params)
    assert jnp.allclose(hidden_out, h_ref, atol=2e-3, rtol=2e-3)
    assert jnp.allclose(logits, l_ref, atol=2e-3, rtol=2e-3)
    assert jnp.allclose(probs, p_ref, atol=2e-3, rtol=2e-3)
    assert jnp.allclose(jnp.sum(probs, axis=1), 1.0, atol=1e-3)

    print("KERNEL_OK")
</pallas_src>

<mosaic_0001>
module attributes {stable_mosaic.version = 11 : i64} {
  func.func @face_mlp_kernel(%arg0: i32, %arg1: memref<8x128xbf16, #tpu.memory_space<vmem>>, %arg2: memref<128x256xbf16, #tpu.memory_space<vmem>>, %arg3: memref<1x256xf32, #tpu.memory_space<vmem>>, %arg4: memref<256x384xbf16, #tpu.memory_space<vmem>>, %arg5: memref<1x384xf32, #tpu.memory_space<vmem>>, %arg6: memref<384x512xbf16, #tpu.memory_space<vmem>>, %arg7: memref<1x512xf32, #tpu.memory_space<vmem>>, %arg8: memref<512x128xbf16, #tpu.memory_space<vmem>>, %arg9: memref<1x128xf32, #tpu.memory_space<vmem>>, %arg10: memref<128x128xbf16, #tpu.memory_space<vmem>>, %arg11: memref<1x128xf32, #tpu.memory_space<vmem>>, %arg12: memref<8x128xf32, #tpu.memory_space<vmem>>, %arg13: memref<8x128xf32, #tpu.memory_space<vmem>>, %arg14: memref<8x128xf32, #tpu.memory_space<vmem>>) attributes {dimension_semantics = [#tpu.dimension_semantics<parallel>], iteration_bounds = array<i64: 2>, scalar_prefetch = 0 : i64, scratch_operands = 0 : i64, tpu.core_type = #tpu.core_type<tc>, window_params = [{transform_indices = @transform_0, window_bounds = array<i64: 8, 128>}, {pipeline_mode = #tpu.pipeline_mode<synchronous>, transform_indices = @transform_1, window_bounds = array<i64: 128, 256>}, {pipeline_mode = #tpu.pipeline_mode<synchronous>, transform_indices = @transform_2, window_bounds = array<i64: 1, 256>}, {pipeline_mode = #tpu.pipeline_mode<synchronous>, transform_indices = @transform_3, window_bounds = array<i64: 256, 384>}, {pipeline_mode = #tpu.pipeline_mode<synchronous>, transform_indices = @transform_4, window_bounds = array<i64: 1, 384>}, {pipeline_mode = #tpu.pipeline_mode<synchronous>, transform_indices = @transform_5, window_bounds = array<i64: 384, 512>}, {pipeline_mode = #tpu.pipeline_mode<synchronous>, transform_indices = @transform_6, window_bounds = array<i64: 1, 512>}, {pipeline_mode = #tpu.pipeline_mode<synchronous>, transform_indices = @transform_7, window_bounds = array<i64: 512, 128>}, {pipeline_mode = #tpu.pipeline_mode<synchronous>, transform_indices = @transform_8, window_bounds = array<i64: 1, 128>}, {pipeline_mode = #tpu.pipeline_mode<synchronous>, transform_indices = @transform_9, window_bounds = array<i64: 128, 128>}, {pipeline_mode = #tpu.pipeline_mode<synchronous>, transform_indices = @transform_10, window_bounds = array<i64: 1, 128>}, {transform_indices = @transform_11, window_bounds = array<i64: 8, 128>}, {transform_indices = @transform_12, window_bounds = array<i64: 8, 128>}, {transform_indices = @transform_13, window_bounds = array<i64: 8, 128>}]} {
    %c0 = arith.constant 0 : index
    %c0_0 = arith.constant 0 : index
    %0 = vector.load %arg1[%c0, %c0_0] : memref<8x128xbf16, #tpu.memory_space<vmem>>, vector<8x128xbf16>
    %c0_1 = arith.constant 0 : index
    %c0_2 = arith.constant 0 : index
    %1 = vector.load %arg2[%c0_1, %c0_2] : memref<128x256xbf16, #tpu.memory_space<vmem>>, vector<128x256xbf16>
    %cst = arith.constant dense<0.000000e+00> : vector<8x256xf32>
    %2 = tpu.matmul %0, %1, %cst {dimension_numbers = #tpu.dot_dimension_numbers<[1], [0], [0], [1], [0, 0, 1, 1], [], []>} : vector<8x128xbf16>, vector<128x256xbf16>, vector<8x256xf32> -> vector<8x256xf32>
    %c0_3 = arith.constant 0 : index
    %c0_4 = arith.constant 0 : index
    %3 = vector.load %arg3[%c0_3, %c0_4] : memref<1x256xf32, #tpu.memory_space<vmem>>, vector<1x256xf32>
    %4 = vector.broadcast %3 : vector<1x256xf32> to vector<8x256xf32>
    %5 = arith.addf %2, %4 : vector<8x256xf32>
    %cst_5 = arith.constant 0.000000e+00 : f32
    %6 = vector.broadcast %cst_5 : f32 to vector<8x256xf32>
    %7 = arith.cmpf ogt, %5, %6 : vector<8x256xf32>
    %cst_6 = arith.constant 5.000000e-02 : f32
    %8 = vector.broadcast %cst_6 : f32 to vector<8x256xf32>
    %9 = arith.mulf %8, %5 : vector<8x256xf32>
    %10 = arith.select %7, %5, %9 : vector<8x256xi1>, vector<8x256xf32>
    %11 = arith.truncf %10 : vector<8x256xf32> to vector<8x256xbf16>
    %c0_7 = arith.constant 0 : index
    %c0_8 = arith.constant 0 : index
    %12 = vector.load %arg4[%c0_7, %c0_8] : memref<256x384xbf16, #tpu.memory_space<vmem>>, vector<256x384xbf16>
    %cst_9 = arith.constant dense<0.000000e+00> : vector<8x384xf32>
    %13 = tpu.matmul %11, %12, %cst_9 {dimension_numbers = #tpu.dot_dimension_numbers<[1], [0], [0], [1], [0, 0, 1, 1], [], []>} : vector<8x256xbf16>, vector<256x384xbf16>, vector<8x384xf32> -> vector<8x384xf32>
    %c0_10 = arith.constant 0 : index
    %c0_11 = arith.constant 0 : index
    %14 = vector.load %arg5[%c0_10, %c0_11] : memref<1x384xf32, #tpu.memory_space<vmem>>, vector<1x384xf32>
    %15 = vector.broadcast %14 : vector<1x384xf32> to vector<8x384xf32>
    %16 = arith.addf %13, %15 : vector<8x384xf32>
    %cst_12 = arith.constant 0.000000e+00 : f32
    %17 = vector.broadcast %cst_12 : f32 to vector<8x384xf32>
    %18 = arith.cmpf ogt, %16, %17 : vector<8x384xf32>
    %cst_13 = arith.constant 5.000000e-02 : f32
    %19 = vector.broadcast %cst_13 : f32 to vector<8x384xf32>
    %20 = arith.mulf %19, %16 : vector<8x384xf32>
    %21 = arith.select %18, %16, %20 : vector<8x384xi1>, vector<8x384xf32>
    %22 = arith.truncf %21 : vector<8x384xf32> to vector<8x384xbf16>
    %c0_14 = arith.constant 0 : index
    %c0_15 = arith.constant 0 : index
    %23 = vector.load %arg6[%c0_14, %c0_15] : memref<384x512xbf16, #tpu.memory_space<vmem>>, vector<384x512xbf16>
    %cst_16 = arith.constant dense<0.000000e+00> : vector<8x512xf32>
    %24 = tpu.matmul %22, %23, %cst_16 {dimension_numbers = #tpu.dot_dimension_numbers<[1], [0], [0], [1], [0, 0, 1, 1], [], []>} : vector<8x384xbf16>, vector<384x512xbf16>, vector<8x512xf32> -> vector<8x512xf32>
    %c0_17 = arith.constant 0 : index
    %c0_18 = arith.constant 0 : index
    %25 = vector.load %arg7[%c0_17, %c0_18] : memref<1x512xf32, #tpu.memory_space<vmem>>, vector<1x512xf32>
    %26 = vector.broadcast %25 : vector<1x512xf32> to vector<8x512xf32>
    %27 = arith.addf %24, %26 : vector<8x512xf32>
    %28 = math.tanh %27 : vector<8x512xf32>
    %29 = arith.truncf %28 : vector<8x512xf32> to vector<8x512xbf16>
    %c0_19 = arith.constant 0 : index
    %c0_20 = arith.constant 0 : index
    %30 = vector.load %arg8[%c0_19, %c0_20] : memref<512x128xbf16, #tpu.memory_space<vmem>>, vector<512x128xbf16>
    %cst_21 = arith.constant dense<0.000000e+00> : vector<8x128xf32>
    %31 = tpu.matmul %29, %30, %cst_21 {dimension_numbers = #tpu.dot_dimension_numbers<[1], [0], [0], [1], [0, 0, 1, 1], [], []>} : vector<8x512xbf16>, vector<512x128xbf16>, vector<8x128xf32> -> vector<8x128xf32>
    %c0_22 = arith.constant 0 : index
    %c0_23 = arith.constant 0 : index
    %32 = vector.load %arg9[%c0_22, %c0_23] : memref<1x128xf32, #tpu.memory_space<vmem>>, vector<1x128xf32>
    %33 = vector.broadcast %32 : vector<1x128xf32> to vector<8x128xf32>
    %34 = arith.addf %31, %33 : vector<8x128xf32>
    %35 = arith.truncf %34 : vector<8x128xf32> to vector<8x128xbf16>
    %c0_24 = arith.constant 0 : index
    %c0_25 = arith.constant 0 : index
    %36 = vector.load %arg10[%c0_24, %c0_25] : memref<128x128xbf16, #tpu.memory_space<vmem>>, vector<128x128xbf16>
    %cst_26 = arith.constant dense<0.000000e+00> : vector<8x128xf32>
    %37 = tpu.matmul %35, %36, %cst_26 {dimension_numbers = #tpu.dot_dimension_numbers<[1], [0], [0], [1], [0, 0, 1, 1], [], []>} : vector<8x128xbf16>, vector<128x128xbf16>, vector<8x128xf32> -> vector<8x128xf32>
    %c0_27 = arith.constant 0 : index
    %c0_28 = arith.constant 0 : index
    %38 = vector.load %arg11[%c0_27, %c0_28] : memref<1x128xf32, #tpu.memory_space<vmem>>, vector<1x128xf32>
    %39 = vector.broadcast %38 : vector<1x128xf32> to vector<8x128xf32>
    %40 = arith.addf %37, %39 : vector<8x128xf32>
    %c0_29 = arith.constant 0 : index
    %c0_30 = arith.constant 0 : index
    %41 = vector.load %arg12[%c0_29, %c0_30] : memref<8x128xf32, #tpu.memory_space<vmem>>, vector<8x128xf32>
    tpu.vector_store %arg12[%c0_29, %c0_30], %34 {strides = array<i32>} : memref<8x128xf32, #tpu.memory_space<vmem>>, vector<8x128xf32>,
    %c0_31 = arith.constant 0 : index
    %c0_32 = arith.constant 0 : index
    %42 = vector.load %arg13[%c0_31, %c0_32] : memref<8x128xf32, #tpu.memory_space<vmem>>, vector<8x128xf32>
    tpu.vector_store %arg13[%c0_31, %c0_32], %40 {strides = array<i32>} : memref<8x128xf32, #tpu.memory_space<vmem>>, vector<8x128xf32>,
    %43 = tpu.iota {dimensions = array<i32: 1>} : vector<8x128xi32>
    %c10_i32 = arith.constant 10 : i32
    %44 = vector.broadcast %c10_i32 : i32 to vector<8x128xi32>
    %45 = arith.cmpi slt, %43, %44 : vector<8x128xi32>
    %cst_33 = arith.constant -1.000000e+30 : f32
    %46 = vector.broadcast %cst_33 : f32 to vector<8x128xf32>
    %47 = arith.select %45, %40, %46 : vector<8x128xi1>, vector<8x128xf32>
    %cst_34 = arith.constant dense<0xFF800000> : vector<8xf32>
    %48 = vector.multi_reduction <maximumf>, %47, %cst_34 [1] : vector<8x128xf32> to vector<8xf32>
    %49 = vector.shape_cast %48 : vector<8xf32> to vector<8x1xf32>
    %50 = vector.broadcast %49 : vector<8x1xf32> to vector<8x128xf32>
    %51 = arith.subf %47, %50 : vector<8x128xf32>
    %52 = math.exp %51 : vector<8x128xf32>
    %cst_35 = arith.constant 0.000000e+00 : f32
    %53 = vector.broadcast %cst_35 : f32 to vector<8x128xf32>
    %54 = arith.select %45, %52, %53 : vector<8x128xi1>, vector<8x128xf32>
    %cst_36 = arith.constant dense<0.000000e+00> : vector<8xf32>
    %55 = vector.multi_reduction <add>, %54, %cst_36 [1] : vector<8x128xf32> to vector<8xf32>
    %56 = vector.shape_cast %55 : vector<8xf32> to vector<8x1xf32>
    %57 = vector.broadcast %56 : vector<8x1xf32> to vector<8x128xf32>
    %58 = arith.divf %54, %57 : vector<8x128xf32>
    %c0_37 = arith.constant 0 : index
    %c0_38 = arith.constant 0 : index
    %59 = vector.load %arg14[%c0_37, %c0_38] : memref<8x128xf32, #tpu.memory_space<vmem>>, vector<8x128xf32>
    tpu.vector_store %arg14[%c0_37, %c0_38], %58 {strides = array<i32>} : memref<8x128xf32, #tpu.memory_space<vmem>>, vector<8x128xf32>,
    return
  }
  func.func @transform_0(%arg0: i32) -> (i32, i32) {
    %c0_i32 = arith.constant 0 : i32
    %c0_i32_0 = arith.constant 0 : i32
    return %arg0, %c0_i32 : i32, i32
  }
  func.func @transform_1(%arg0: i32) -> (i32, i32) {
    %c0_i32 = arith.constant 0 : i32
    %c0_i32_0 = arith.constant 0 : i32
    %c0_i32_1 = arith.constant 0 : i32
    return %c0_i32, %c0_i32_0 : i32, i32
  }
  func.func @transform_2(%arg0: i32) -> (i32, i32) {
    %c0_i32 = arith.constant 0 : i32
    %c0_i32_0 = arith.constant 0 : i32
    %c0_i32_1 = arith.constant 0 : i32
    return %c0_i32, %c0_i32_0 : i32, i32
  }
  func.func @transform_3(%arg0: i32) -> (i32, i32) {
    %c0_i32 = arith.constant 0 : i32
    %c0_i32_0 = arith.constant 0 : i32
    %c0_i32_1 = arith.constant 0 : i32
    return %c0_i32, %c0_i32_0 : i32, i32
  }
  func.func @transform_4(%arg0: i32) -> (i32, i32) {
    %c0_i32 = arith.constant 0 : i32
    %c0_i32_0 = arith.constant 0 : i32
    %c0_i32_1 = arith.constant 0 : i32
    return %c0_i32, %c0_i32_0 : i32, i32
  }
  func.func @transform_5(%arg0: i32) -> (i32, i32) {
    %c0_i32 = arith.constant 0 : i32
    %c0_i32_0 = arith.constant 0 : i32
    %c0_i32_1 = arith.constant 0 : i32
    return %c0_i32, %c0_i32_0 : i32, i32
  }
  func.func @transform_6(%arg0: i32) -> (i32, i32) {
    %c0_i32 = arith.constant 0 : i32
    %c0_i32_0 = arith.constant 0 : i32
    %c0_i32_1 = arith.constant 0 : i32
    return %c0_i32, %c0_i32_0 : i32, i32
  }
  func.func @transform_7(%arg0: i32) -> (i32, i32) {
    %c0_i32 = arith.constant 0 : i32
    %c0_i32_0 = arith.constant 0 : i32
    %c0_i32_1 = arith.constant 0 : i32
    return %c0_i32, %c0_i32_0 : i32, i32
  }
  func.func @transform_8(%arg0: i32) -> (i32, i32) {
    %c0_i32 = arith.constant 0 : i32
    %c0_i32_0 = arith.constant 0 : i32
    %c0_i32_1 = arith.constant 0 : i32
    return %c0_i32, %c0_i32_0 : i32, i32
  }
  func.func @transform_9(%arg0: i32) -> (i32, i32) {
    %c0_i32 = arith.constant 0 : i32
    %c0_i32_0 = arith.constant 0 : i32
    %c0_i32_1 = arith.constant 0 : i32
    return %c0_i32, %c0_i32_0 : i32, i32
  }
  func.func @transform_10(%arg0: i32) -> (i32, i32) {
    %c0_i32 = arith.constant 0 : i32
    %c0_i32_0 = arith.constant 0 : i32
    %c0_i32_1 = arith.constant 0 : i32
    return %c0_i32, %c0_i32_0 : i32, i32
  }
  func.func @transform_11(%arg0: i32) -> (i32, i32) {
    %c0_i32 = arith.constant 0 : i32
    %c0_i32_0 = arith.constant 0 : i32
    return %arg0, %c0_i32 : i32, i32
  }
  func.func @transform_12(%arg0: i32) -> (i32, i32) {
    %c0_i32 = arith.constant 0 : i32
    %c0_i32_0 = arith.constant 0 : i32
    return %arg0, %c0_i32 : i32, i32
  }
  func.func @transform_13(%arg0: i32) -> (i32, i32) {
    %c0_i32 = arith.constant 0 : i32
    %c0_i32_0 = arith.constant 0 : i32
    return %arg0, %c0_i32 : i32, i32
  }
}

</mosaic_0001>

<llo_original>
// kernel: tpu_custom_call.1
$region0: #{tpu_custom_call.1}
  #allocation0 [shape = 'u32[]', space=smem, size = 0x4, offset = 0x4, fixed_abs, tag = 'smem constant byte address 0x4 - core index']
  #allocation1 [shape = 'u32[72,128]{1,0:T(1,128)}', space=vmem, size = 0x9000, scoped, tag = 'internal scratch']
  %s0 = inlined_call_operand.hbm [shape: bf16[16,128], index: 0, kind: input, shape index: {}]
  %s1 = inlined_call_operand.hbm [shape: bf16[128,256], index: 1, kind: input, shape index: {}]
  %s2 = inlined_call_operand.hbm [shape: f32[1,256], index: 2, kind: input, shape index: {}]
  %s3 = inlined_call_operand.hbm [shape: bf16[256,384], index: 3, kind: input, shape index: {}]
  %s4 = inlined_call_operand.hbm [shape: f32[1,384], index: 4, kind: input, shape index: {}]
  %s5 = inlined_call_operand.hbm [shape: bf16[384,512], index: 5, kind: input, shape index: {}]
  %s6 = inlined_call_operand.vmem [shape: f32[1,512], index: 6, kind: input, shape index: {}]
  %s7 = inlined_call_operand.hbm [shape: bf16[512,128], index: 7, kind: input, shape index: {}]
  %s8 = inlined_call_operand.vmem [shape: f32[1,128], index: 8, kind: input, shape index: {}]
  %s9 = inlined_call_operand.hbm [shape: bf16[128,128], index: 9, kind: input, shape index: {}]
  %s10 = inlined_call_operand.vmem [shape: f32[1,128], index: 10, kind: input, shape index: {}]
  %s11 = inlined_call_operand.hbm [shape: f32[16,128], index: 11, kind: output, shape index: {0}]
  %s12 = inlined_call_operand.hbm [shape: f32[16,128], index: 12, kind: output, shape index: {1}]
  %s13 = inlined_call_operand.hbm [shape: f32[16,128], index: 13, kind: output, shape index: {2}]
  %14 = xla_tuple %s11, %s12, %s13
  %s15 = sld [smem:[#allocation0]]
  $region125: #{tpu_custom_call.1} parent=0
    _
  %s17 = ssub.s32 1, %s15
  %s18 = scalar_select 0, %s17, %s15
  $region1: #{tpu_custom_call.1} parent=0
    #allocation2 [shape = 'u8[4096]{0}', space=vmem, size = 0x1000, scoped, tag = 'input window, operand 0']
    #allocation3 [shape = 's32[2]{0}', space=sflag, size = 0x8, scoped, tag = 'scoped memory for tpu_custom_call.1']
    #allocation4 [shape = 's32[2]{0}', space=sflag, size = 0x8, scoped, tag = 'scoped memory for tpu_custom_call.1']
    #allocation5 [shape = 'u8[65536]{0}', space=vmem, size = 0x10000, scoped, tag = 'input window, operand 1, single buffered']
    #allocation6 [shape = 's32[1]{0}', space=sflag, size = 0x4, scoped, tag = 'scoped memory for tpu_custom_call.1']
    #allocation7 [shape = 'u8[1024]{0}', space=vmem, size = 0x400, scoped, tag = 'input window, operand 2, single buffered']
    #allocation8 [shape = 'u8[196608]{0}', space=vmem, size = 0x30000, scoped, tag = 'input window, operand 3, single buffered']
    #allocation9 [shape = 's32[1]{0}', space=sflag, size = 0x4, scoped, tag = 'scoped memory for tpu_custom_call.1']
    #allocation10 [shape = 'u8[1536]{0}', space=vmem, size = 0x800, scoped, tag = 'input window, operand 4, single buffered']
    #allocation11 [shape = 'u8[393216]{0}', space=vmem, size = 0x60000, scoped, tag = 'input window, operand 5, single buffered']
    #allocation12 [shape = 's32[1]{0}', space=sflag, size = 0x4, scoped, tag = 'scoped memory for tpu_custom_call.1']
    #allocation13 [shape = 'u8[131072]{0}', space=vmem, size = 0x20000, scoped, tag = 'input window, operand 7, single buffered']
    #allocation14 [shape = 'u8[32768]{0}', space=vmem, size = 0x8000, scoped, tag = 'input window, operand 9, single buffered']
    #allocation15 [shape = 's32[1]{0}', space=sflag, size = 0x4, scoped, tag = 'scoped memory for tpu_custom_call.1']
    #allocation16 [shape = 'u8[8192]{0}', space=vmem, size = 0x2000, scoped, tag = 'output window, operand 0']
    #allocation17 [shape = 'u8[8192]{0}', space=vmem, size = 0x2000, scoped, tag = 'output window, operand 1']
    #allocation18 [shape = 's32[2]{0}', space=sflag, size = 0x8, scoped, tag = 'scoped memory for tpu_custom_call.1']
    #allocation19 [shape = 'u8[8192]{0}', space=vmem, size = 0x2000, scoped, tag = 'output window, operand 2']
    %19 = vsyncpa [#allocation3], 0
    %s20 = scalar_lea.sflag [#allocation3], 1
    %21 = vsyncpa %s20, 0
    %22 = vsyncpa [#allocation6], 0
    %23 = vsyncpa [#allocation9], 0
    %24 = vsyncpa [#allocation12], 0
    %25 = vsyncpa [#allocation15], 0
    %26 = vsyncpa [#allocation4], 0
    %s27 = scalar_lea.sflag [#allocation4], 1
    %28 = vsyncpa %s27, 0
    %29 = vsyncpa [#allocation18], 0
    %s30 = scalar_lea.sflag [#allocation18], 1
    %31 = vsyncpa %s30, 0
    loop: start=0, step=1, limit=4
    $region2: #{tpu_custom_call.1} parent=1 // loop_pre_header
      _
    $region3: #{tpu_custom_call.1} parent=1 // loop_header
      %s33 = sphi 0, %s37
      %p34 = scmp.ge.s32.totalorder %s33, 4
      %s43 = sphi 0, %s45
      %s46 = sphi 0, %s43
      %s47 = sphi 0, %s46
      %s63 = sphi 0, %s47
      %s67 = sphi 0, %s67
      %s69 = sphi 0, %s67
      %s70 = sphi 0, %s69
      %s84 = sphi 0, %s70
      %s88 = sphi 0, %s88
      %s90 = sphi 0, %s88
      %s91 = sphi 0, %s90
      %s105 = sphi 0, %s91
      %s109 = sphi 0, %s109
      %s111 = sphi 0, %s109
      %s112 = sphi 0, %s111
      %s126 = sphi 0, %s112
      %s130 = sphi 0, %s130
      %s132 = sphi 0, %s130
      %s133 = sphi 0, %s132
      %s147 = sphi 0, %s133
      %s151 = sphi 0, %s151
      %s153 = sphi 0, %s151
      %s154 = sphi 0, %s153
      %s168 = sphi 0, %s154
      %s172 = sphi 0, %s172
      %s174 = sphi 0, %s172
      %s175 = sphi 0, %s174
      %s189 = sphi 0, %s175
      %s193 = sphi 0, %s193
      %s195 = sphi 0, %s193
      %s196 = sphi 0, %s195
      %s210 = sphi 0, %s196
      %s214 = sphi 0, %s214
      %s216 = sphi 0, %s214
      %s217 = sphi 0, %s216
      %s231 = sphi 0, %s217
      %s235 = sphi 0, %s235
      %s237 = sphi 0, %s235
      %s238 = sphi 0, %s237
      %s252 = sphi 0, %s238
      %s256 = sphi 0, %s256
      %s258 = sphi 0, %s256
      %s259 = sphi 0, %s258
      %s273 = sphi 0, %s259
      %s279 = sphi 0, %s281
      %s282 = sphi 0, %s279
      %s283 = sphi 0, %s282
      %s299 = sphi 0, %s283
      %s305 = sphi 0, %s307
      %s308 = sphi 0, %s305
      %s309 = sphi 0, %s308
      %s325 = sphi 0, %s309
      %s331 = sphi 0, %s333
      %s334 = sphi 0, %s331
      %s335 = sphi 0, %s334
      %s351 = sphi 0, %s335
    $region4: #{tpu_custom_call.1} parent=1 // loop_header_branch
      %36 = sbr.rel (%p34) target = $region8
    $region5: #{tpu_custom_call.1} parent=1 // loop_body
      %s38 = ssub.s32 %s33, 1
      %s39 = ssub.s32 %s33, 2
      %s40 = sadd.s32 %s33, 1
      %s41 = ssub.s32 %s33, %s40
      %p42 = scmp.eq.s32.totalorder %s41, 0
      %s44 = sadd.s32 %s43, 1
      %s45 = scalar_select %p42, %s43, %s44
      %p48 = pneg %p42
      %p49 = scmp.eq.s32.totalorder %s33, 1
      %p50 = por %p48, %p49
      %p51 = scmp.ne.s32.totalorder %s43, %s46
      %p52 = scmp.eq.s32.totalorder %s33, 0
      %p53 = por %p51, %p52
      %p54 = scmp.ne.s32.totalorder %s43, %s46
      %p55 = scmp.eq.s32.totalorder %s38, 1
      %p56 = por %p54, %p55
      %p57 = scmp.ne.s32.totalorder %s46, %s47
      %p58 = scmp.eq.s32.totalorder %s38, 0
      %p59 = por %p57, %p58
      %p60 = scmp.ne.s32.totalorder %s46, %s47
      %p61 = scmp.eq.s32.totalorder %s39, 1
      %p62 = por %p60, %p61
      %p64 = scmp.ne.s32.totalorder %s47, %s63
      %p65 = scmp.eq.s32.totalorder %s39, 0
      %p66 = por %p64, %p65
      %s68 = sadd.s32 %s67, 1
      %p71 = scmp.eq.s32.totalorder %s33, 1
      %p72 = scmp.ne.s32.totalorder %s67, %s69
      %p73 = scmp.eq.s32.totalorder %s33, 0
      %p74 = por %p72, %p73
      %p75 = scmp.ne.s32.totalorder %s67, %s69
      %p76 = scmp.eq.s32.totalorder %s38, 1
      %p77 = por %p75, %p76
      %p78 = scmp.ne.s32.totalorder %s69, %s70
      %p79 = scmp.eq.s32.totalorder %s38, 0
      %p80 = por %p78, %p79
      %p81 = scmp.ne.s32.totalorder %s69, %s70
      %p82 = scmp.eq.s32.totalorder %s39, 1
      %p83 = por %p81, %p82
      %p85 = scmp.ne.s32.totalorder %s70, %s84
      %p86 = scmp.eq.s32.totalorder %s39, 0
      %p87 = por %p85, %p86
      %s89 = sadd.s32 %s88, 1
      %p92 = scmp.eq.s32.totalorder %s33, 1
      %p93 = scmp.ne.s32.totalorder %s88, %s90
      %p94 = scmp.eq.s32.totalorder %s33, 0
      %p95 = por %p93, %p94
      %p96 = scmp.ne.s32.totalorder %s88, %s90
      %p97 = scmp.eq.s32.totalorder %s38, 1
      %p98 = por %p96, %p97
      %p99 = scmp.ne.s32.totalorder %s90, %s91
      %p100 = scmp.eq.s32.totalorder %s38, 0
      %p101 = por %p99, %p100
      %p102 = scmp.ne.s32.totalorder %s90, %s91
      %p103 = scmp.eq.s32.totalorder %s39, 1
      %p104 = por %p102, %p103
      %p106 = scmp.ne.s32.totalorder %s91, %s105
      %p107 = scmp.eq.s32.totalorder %s39, 0
      %p108 = por %p106, %p107
      %s110 = sadd.s32 %s109, 1
      %p113 = scmp.eq.s32.totalorder %s33, 1
      %p114 = scmp.ne.s32.totalorder %s109, %s111
      %p115 = scmp.eq.s32.totalorder %s33, 0
      %p116 = por %p114, %p115
      %p117 = scmp.ne.s32.totalorder %s109, %s111
      %p118 = scmp.eq.s32.totalorder %s38, 1
      %p119 = por %p117, %p118
      %p120 = scmp.ne.s32.totalorder %s111, %s112
      %p121 = scmp.eq.s32.totalorder %s38, 0
      %p122 = por %p120, %p121
      %p123 = scmp.ne.s32.totalorder %s111, %s112
      %p124 = scmp.eq.s32.totalorder %s39, 1
      %p125 = por %p123, %p124
      %p127 = scmp.ne.s32.totalorder %s112, %s126
      %p128 = scmp.eq.s32.totalorder %s39, 0
      %p129 = por %p127, %p128
      %s131 = sadd.s32 %s130, 1
      %p134 = scmp.eq.s32.totalorder %s33, 1
      %p135 = scmp.ne.s32.totalorder %s130, %s132
      %p136 = scmp.eq.s32.totalorder %s33, 0
      %p137 = por %p135, %p136
      %p138 = scmp.ne.s32.totalorder %s130, %s132
      %p139 = scmp.eq.s32.totalorder %s38, 1
      %p140 = por %p138, %p139
      %p141 = scmp.ne.s32.totalorder %s132, %s133
      %p142 = scmp.eq.s32.totalorder %s38, 0
      %p143 = por %p141, %p142
      %p144 = scmp.ne.s32.totalorder %s132, %s133
      %p145 = scmp.eq.s32.totalorder %s39, 1
      %p146 = por %p144, %p145
      %p148 = scmp.ne.s32.totalorder %s133, %s147
      %p149 = scmp.eq.s32.totalorder %s39, 0
      %p150 = por %p148, %p149
      %s152 = sadd.s32 %s151, 1
      %p155 = scmp.eq.s32.totalorder %s33, 1
      %p156 = scmp.ne.s32.totalorder %s151, %s153
      %p157 = scmp.eq.s32.totalorder %s33, 0
      %p158 = por %p156, %p157
      %p159 = scmp.ne.s32.totalorder %s151, %s153
      %p160 = scmp.eq.s32.totalorder %s38, 1
      %p161 = por %p159, %p160
      %p162 = scmp.ne.s32.totalorder %s153, %s154
      %p163 = scmp.eq.s32.totalorder %s38, 0
      %p164 = por %p162, %p163
      %p165 = scmp.ne.s32.totalorder %s153, %s154
      %p166 = scmp.eq.s32.totalorder %s39, 1
      %p167 = por %p165, %p166
      %p169 = scmp.ne.s32.totalorder %s154, %s168
      %p170 = scmp.eq.s32.totalorder %s39, 0
      %p171 = por %p169, %p170
      %s173 = sadd.s32 %s172, 1
      %p176 = scmp.eq.s32.totalorder %s33, 1
      %p177 = scmp.ne.s32.totalorder %s172, %s174
      %p178 = scmp.eq.s32.totalorder %s33, 0
      %p179 = por %p177, %p178
      %p180 = scmp.ne.s32.totalorder %s172, %s174
      %p181 = scmp.eq.s32.totalorder %s38, 1
      %p182 = por %p180, %p181
      %p183 = scmp.ne.s32.totalorder %s174, %s175
      %p184 = scmp.eq.s32.totalorder %s38, 0
      %p185 = por %p183, %p184
      %p186 = scmp.ne.s32.totalorder %s174, %s175
      %p187 = scmp.eq.s32.totalorder %s39, 1
      %p188 = por %p186, %p187
      %p190 = scmp.ne.s32.totalorder %s175, %s189
      %p191 = scmp.eq.s32.totalorder %s39, 0
      %p192 = por %p190, %p191
      %s194 = sadd.s32 %s193, 1
      %p197 = scmp.eq.s32.totalorder %s33, 1
      %p198 = scmp.ne.s32.totalorder %s193, %s195
      %p199 = scmp.eq.s32.totalorder %s33, 0
      %p200 = por %p198, %p199
      %p201 = scmp.ne.s32.totalorder %s193, %s195
      %p202 = scmp.eq.s32.totalorder %s38, 1
      %p203 = por %p201, %p202
      %p204 = scmp.ne.s32.totalorder %s195, %s196
      %p205 = scmp.eq.s32.totalorder %s38, 0
      %p206 = por %p204, %p205
      %p207 = scmp.ne.s32.totalorder %s195, %s196
      %p208 = scmp.eq.s32.totalorder %s39, 1
      %p209 = por %p207, %p208
      %p211 = scmp.ne.s32.totalorder %s196, %s210
      %p212 = scmp.eq.s32.totalorder %s39, 0
      %p213 = por %p211, %p212
      %s215 = sadd.s32 %s214, 1
      %p218 = scmp.eq.s32.totalorder %s33, 1
      %p219 = scmp.ne.s32.totalorder %s214, %s216
      %p220 = scmp.eq.s32.totalorder %s33, 0
      %p221 = por %p219, %p220
      %p222 = scmp.ne.s32.totalorder %s214, %s216
      %p223 = scmp.eq.s32.totalorder %s38, 1
      %p224 = por %p222, %p223
      %p225 = scmp.ne.s32.totalorder %s216, %s217
      %p226 = scmp.eq.s32.totalorder %s38, 0
      %p227 = por %p225, %p226
      %p228 = scmp.ne.s32.totalorder %s216, %s217
      %p229 = scmp.eq.s32.totalorder %s39, 1
      %p230 = por %p228, %p229
      %p232 = scmp.ne.s32.totalorder %s217, %s231
      %p233 = scmp.eq.s32.totalorder %s39, 0
      %p234 = por %p232, %p233
      %s236 = sadd.s32 %s235, 1
      %p239 = scmp.eq.s32.totalorder %s33, 1
      %p240 = scmp.ne.s32.totalorder %s235, %s237
      %p241 = scmp.eq.s32.totalorder %s33, 0
      %p242 = por %p240, %p241
      %p243 = scmp.ne.s32.totalorder %s235, %s237
      %p244 = scmp.eq.s32.totalorder %s38, 1
      %p245 = por %p243, %p244
      %p246 = scmp.ne.s32.totalorder %s237, %s238
      %p247 = scmp.eq.s32.totalorder %s38, 0
      %p248 = por %p246, %p247
      %p249 = scmp.ne.s32.totalorder %s237, %s238
      %p250 = scmp.eq.s32.totalorder %s39, 1
      %p251 = por %p249, %p250
      %p253 = scmp.ne.s32.totalorder %s238, %s252
      %p254 = scmp.eq.s32.totalorder %s39, 0
      %p255 = por %p253, %p254
      %s257 = sadd.s32 %s256, 1
      %p260 = scmp.eq.s32.totalorder %s33, 1
      %p261 = scmp.ne.s32.totalorder %s256, %s258
      %p262 = scmp.eq.s32.totalorder %s33, 0
      %p263 = por %p261, %p262
      %p264 = scmp.ne.s32.totalorder %s256, %s258
      %p265 = scmp.eq.s32.totalorder %s38, 1
      %p266 = por %p264, %p265
      %p267 = scmp.ne.s32.totalorder %s258, %s259
      %p268 = scmp.eq.s32.totalorder %s38, 0
      %p269 = por %p267, %p268
      %p270 = scmp.ne.s32.totalorder %s258, %s259
      %p271 = scmp.eq.s32.totalorder %s39, 1
      %p272 = por %p270, %p271
      %p274 = scmp.ne.s32.totalorder %s259, %s273
      %p275 = scmp.eq.s32.totalorder %s39, 0
      %p276 = por %p274, %p275
      %s277 = ssub.s32 %s33, %s40
      %p278 = scmp.eq.s32.totalorder %s277, 0
      %s280 = sadd.s32 %s279, 1
      %s281 = scalar_select %p278, %s279, %s280
      %p284 = pneg %p278
      %p285 = scmp.eq.s32.totalorder %s33, 1
      %p286 = por %p284, %p285
      %p287 = scmp.ne.s32.totalorder %s279, %s282
      %p288 = scmp.eq.s32.totalorder %s33, 0
      %p289 = por %p287, %p288
      %p290 = scmp.ne.s32.totalorder %s279, %s282
      %p291 = scmp.eq.s32.totalorder %s38, 1
      %p292 = por %p290, %p291
      %p293 = scmp.ne.s32.totalorder %s282, %s283
      %p294 = scmp.eq.s32.totalorder %s38, 0
      %p295 = por %p293, %p294
      %p296 = scmp.ne.s32.totalorder %s282, %s283
      %p297 = scmp.eq.s32.totalorder %s39, 1
      %p298 = por %p296, %p297
      %p300 = scmp.ne.s32.totalorder %s283, %s299
      %p301 = scmp.eq.s32.totalorder %s39, 0
      %p302 = por %p300, %p301
      %s303 = ssub.s32 %s33, %s40
      %p304 = scmp.eq.s32.totalorder %s303, 0
      %s306 = sadd.s32 %s305, 1
      %s307 = scalar_select %p304, %s305, %s306
      %p310 = pneg %p304
      %p311 = scmp.eq.s32.totalorder %s33, 1
      %p312 = por %p310, %p311
      %p313 = scmp.ne.s32.totalorder %s305, %s308
      %p314 = scmp.eq.s32.totalorder %s33, 0
      %p315 = por %p313, %p314
      %p316 = scmp.ne.s32.totalorder %s305, %s308
      %p317 = scmp.eq.s32.totalorder %s38, 1
      %p318 = por %p316, %p317
      %p319 = scmp.ne.s32.totalorder %s308, %s309
      %p320 = scmp.eq.s32.totalorder %s38, 0
      %p321 = por %p319, %p320
      %p322 = scmp.ne.s32.totalorder %s308, %s309
      %p323 = scmp.eq.s32.totalorder %s39, 1
      %p324 = por %p322, %p323
      %p326 = scmp.ne.s32.totalorder %s309, %s325
      %p327 = scmp.eq.s32.totalorder %s39, 0
      %p328 = por %p326, %p327
      %s329 = ssub.s32 %s33, %s40
      %p330 = scmp.eq.s32.totalorder %s329, 0
      %s332 = sadd.s32 %s331, 1
      %s333 = scalar_select %p330, %s331, %s332
      %p336 = pneg %p330
      %p337 = scmp.eq.s32.totalorder %s33, 1
      %p338 = por %p336, %p337
      %p339 = scmp.ne.s32.totalorder %s331, %s334
      %p340 = scmp.eq.s32.totalorder %s33, 0
      %p341 = por %p339, %p340
      %p342 = scmp.ne.s32.totalorder %s331, %s334
      %p343 = scmp.eq.s32.totalorder %s38, 1
      %p344 = por %p342, %p343
      %p345 = scmp.ne.s32.totalorder %s334, %s335
      %p346 = scmp.eq.s32.totalorder %s38, 0
      %p347 = por %p345, %p346
      %p348 = scmp.ne.s32.totalorder %s334, %s335
      %p349 = scmp.eq.s32.totalorder %s39, 1
      %p350 = por %p348, %p349
      %p352 = scmp.ne.s32.totalorder %s335, %s351
      %p353 = scmp.eq.s32.totalorder %s39, 0
      %p354 = por %p352, %p353
      %p355 = scmp.le.s32.totalorder 1, %s33
      %p356 = scmp.lt.s32.totalorder %s33, 3
      %p357 = pnand %p355, %p356
      %p358 = pneg %p357
      // Predicated region
      $region9: #{tpu_custom_call.1} parent=5 // pred_check
        _
      $region10: #{tpu_custom_call.1} parent=5 // pred_check_branch
        %360 = sbr.rel (%p357) target = $region12
      $region11: #{tpu_custom_call.1} parent=5 // pred_region
        %s361 = ssub.s32 %s33, 1
        // Predicated region
        $region13: #{tpu_custom_call.1} parent=11 // pred_check
          %p362 = pneg %p80
        $region14: #{tpu_custom_call.1} parent=11 // pred_check_branch
          %364 = sbr.rel (%p362) target = $region16
        $region15: #{tpu_custom_call.1} parent=11 // pred_region
          %366 = vsyncadd [#allocation6], 0
          %s367 = sshll.u32 %s1, 4
          %s368 = int_to_ptr.hbm [resolvable:$true] %s367
          %s369 = sshll.u32 [#allocation5], 4
          %s370 = int_to_ptr.vmem [resolvable:$true] %s369
          %375 = dma.hbm_to_vmem [thread:$0]  %s368, 2048, %s370, [#allocation6], 128, 128, 8
        $region16: #{tpu_custom_call.1} parent=11 // pred_fallthru
          _
        // Predicated region
        $region17: #{tpu_custom_call.1} parent=11 // pred_check
          %p376 = pneg %p101
        $region18: #{tpu_custom_call.1} parent=11 // pred_check_branch
          %378 = sbr.rel (%p376) target = $region20
        $region19: #{tpu_custom_call.1} parent=11 // pred_region
          %380 = vsyncadd [#allocation6], 0
          %s382 = sshll.u32 %s2, 4
          %s383 = int_to_ptr.hbm [resolvable:$true] %s382
          %s384 = sshll.u32 [#allocation7], 4
          %s385 = int_to_ptr.vmem [resolvable:$true] %s384
          %387 = dma.hbm_to_vmem [thread:$0]  %s383, 32, %s385, [#allocation6]
        $region20: #{tpu_custom_call.1} parent=11 // pred_fallthru
          _
        // Predicated region
        $region21: #{tpu_custom_call.1} parent=11 // pred_check
          %p388 = pneg %p122
        $region22: #{tpu_custom_call.1} parent=11 // pred_check_branch
          %390 = sbr.rel (%p388) target = $region24
        $region23: #{tpu_custom_call.1} parent=11 // pred_region
          %392 = vsyncadd [#allocation9], 0
          %s393 = sshll.u32 %s3, 4
          %s394 = int_to_ptr.hbm [resolvable:$true] %s393
          %s395 = sshll.u32 [#allocation8], 4
          %s396 = int_to_ptr.vmem [resolvable:$true] %s395
          %401 = dma.hbm_to_vmem [thread:$0]  %s394, 6144, %s396, [#allocation9], 192, 192, 12
        $region24: #{tpu_custom_call.1} parent=11 // pred_fallthru
          _
        // Predicated region
        $region25: #{tpu_custom_call.1} parent=11 // pred_check
          %p402 = pneg %p143
        $region26: #{tpu_custom_call.1} parent=11 // pred_check_branch
          %404 = sbr.rel (%p402) target = $region28
        $region27: #{tpu_custom_call.1} parent=11 // pred_region
          %406 = vsyncadd [#allocation9], 0
          %s408 = sshll.u32 %s4, 4
          %s409 = int_to_ptr.hbm [resolvable:$true] %s408
          %s410 = sshll.u32 [#allocation10], 4
          %s411 = int_to_ptr.vmem [resolvable:$true] %s410
          %413 = dma.hbm_to_vmem [thread:$0]  %s409, 48, %s411, [#allocation9]
        $region28: #{tpu_custom_call.1} parent=11 // pred_fallthru
          _
        // Predicated region
        $region29: #{tpu_custom_call.1} parent=11 // pred_check
          %p414 = pneg %p164
        $region30: #{tpu_custom_call.1} parent=11 // pred_check_branch
          %416 = sbr.rel (%p414) target = $region32
        $region31: #{tpu_custom_call.1} parent=11 // pred_region
          %418 = vsyncadd [#allocation12], 0
          %s419 = sshll.u32 %s5, 4
          %s420 = int_to_ptr.hbm [resolvable:$true] %s419
          %s421 = sshll.u32 [#allocation11], 4
          %s422 = int_to_ptr.vmem [resolvable:$true] %s421
          %427 = dma.hbm_to_vmem [thread:$0]  %s420, 12288, %s422, [#allocation12], 256, 256, 16
        $region32: #{tpu_custom_call.1} parent=11 // pred_fallthru
          _
        // Predicated region
        $region33: #{tpu_custom_call.1} parent=11 // pred_check
          %p428 = pneg %p185
        $region34: #{tpu_custom_call.1} parent=11 // pred_check_branch
          %430 = sbr.rel (%p428) target = $region36
        $region35: #{tpu_custom_call.1} parent=11 // pred_region
          _
        $region36: #{tpu_custom_call.1} parent=11 // pred_fallthru
          _
        // Predicated region
        $region37: #{tpu_custom_call.1} parent=11 // pred_check
          %p431 = pneg %p206
        $region38: #{tpu_custom_call.1} parent=11 // pred_check_branch
          %433 = sbr.rel (%p431) target = $region40
        $region39: #{tpu_custom_call.1} parent=11 // pred_region
          %435 = vsyncadd [#allocation12], 0
          %s436 = sshll.u32 %s7, 4
          %s437 = int_to_ptr.hbm [resolvable:$true] %s436
          %s438 = sshll.u32 [#allocation13], 4
          %s439 = int_to_ptr.vmem [resolvable:$true] %s438
          %444 = dma.hbm_to_vmem [thread:$0]  %s437, 4096, %s439, [#allocation12], 64, 64, 4
        $region40: #{tpu_custom_call.1} parent=11 // pred_fallthru
          _
        // Predicated region
        $region41: #{tpu_custom_call.1} parent=11 // pred_check
          %p445 = pneg %p227
        $region42: #{tpu_custom_call.1} parent=11 // pred_check_branch
          %447 = sbr.rel (%p445) target = $region44
        $region43: #{tpu_custom_call.1} parent=11 // pred_region
          _
        $region44: #{tpu_custom_call.1} parent=11 // pred_fallthru
          _
        // Predicated region
        $region45: #{tpu_custom_call.1} parent=11 // pred_check
          %p448 = pneg %p248
        $region46: #{tpu_custom_call.1} parent=11 // pred_check_branch
          %450 = sbr.rel (%p448) target = $region48
        $region47: #{tpu_custom_call.1} parent=11 // pred_region
          %452 = vsyncadd [#allocation15], 0
          %s453 = sshll.u32 %s9, 4
          %s454 = int_to_ptr.hbm [resolvable:$true] %s453
          %s455 = sshll.u32 [#allocation14], 4
          %s456 = int_to_ptr.vmem [resolvable:$true] %s455
          %461 = dma.hbm_to_vmem [thread:$0]  %s454, 1024, %s456, [#allocation15], 64, 64, 4
        $region48: #{tpu_custom_call.1} parent=11 // pred_fallthru
          _
        // Predicated region
        $region49: #{tpu_custom_call.1} parent=11 // pred_check
          %p462 = pneg %p269
        $region50: #{tpu_custom_call.1} parent=11 // pred_check_branch
          %464 = sbr.rel (%p462) target = $region52
        $region51: #{tpu_custom_call.1} parent=11 // pred_region
          _
        $region52: #{tpu_custom_call.1} parent=11 // pred_fallthru
          _
      $region12: #{tpu_custom_call.1} parent=5 // pred_fallthru
        _
      %p465 = scmp.lt.s32.totalorder %s33, 2
      // Predicated region
      $region53: #{tpu_custom_call.1} parent=5 // pred_check
        %p466 = pneg %p465
      $region54: #{tpu_custom_call.1} parent=5 // pred_check_branch
        %468 = sbr.rel (%p466) target = $region56
      $region55: #{tpu_custom_call.1} parent=5 // pred_region
        // Predicated region
        $region57: #{tpu_custom_call.1} parent=55 // pred_check
          %p469 = pneg %p53
        $region58: #{tpu_custom_call.1} parent=55 // pred_check_branch
          %471 = sbr.rel (%p469) target = $region60
        $region59: #{tpu_custom_call.1} parent=55 // pred_region
          %s472 = sand.u32 %s43, 1
          %s473 = scalar_lea.sflag [#allocation3], %s472
          %s474 = sand.u32 %s43, 1
          %s475 = smul.addr %s474, 4
          %s476 = scalar_lea.vmem [#allocation2], %s475
          %478 = vsyncadd %s473, 0
          %s479 = smul.addr %s33, 4
          %s480 = scalar_lea.hbm %s0, %s479
          %s482 = sshll.u32 %s480, 4
          %s483 = int_to_ptr.hbm [resolvable:$true] %s482
          %s484 = sshll.u32 %s476, 4
          %s485 = int_to_ptr.vmem [resolvable:$true] %s484
          %487 = dma.hbm_to_vmem [thread:$0]  %s483, 64, %s485, %s473
        $region60: #{tpu_custom_call.1} parent=55 // pred_fallthru
          _
      $region56: #{tpu_custom_call.1} parent=5 // pred_fallthru
        _
      %p488 = scmp.le.s32.totalorder 1, %s33
      %p489 = scmp.lt.s32.totalorder %s33, 3
      %p490 = pnand %p488, %p489
      %p491 = pneg %p490
      // Predicated region
      $region61: #{tpu_custom_call.1} parent=5 // pred_check
        _
      $region62: #{tpu_custom_call.1} parent=5 // pred_check_branch
        %493 = sbr.rel (%p490) target = $region64
      $region63: #{tpu_custom_call.1} parent=5 // pred_region
        %s494 = ssub.s32 %s33, 1
        %s495 = sand.u32 %s46, 1
        %s496 = scalar_lea.sflag [#allocation3], %s495
        %s497 = sand.u32 %s46, 1
        %s498 = smul.addr %s497, 4
        %s499 = scalar_lea.vmem [#allocation2], %s498
        // Predicated region
        $region65: #{tpu_custom_call.1} parent=63 // pred_check
          %p500 = pneg %p59
        $region66: #{tpu_custom_call.1} parent=63 // pred_check_branch
          %502 = sbr.rel (%p500) target = $region68
        $region67: #{tpu_custom_call.1} parent=63 // pred_region
          %504 = dma.done %s496, 64
        $region68: #{tpu_custom_call.1} parent=63 // pred_fallthru
          _
        // Predicated region
        $region69: #{tpu_custom_call.1} parent=63 // pred_check
          %p505 = pneg %p80
        $region70: #{tpu_custom_call.1} parent=63 // pred_check_branch
          %507 = sbr.rel (%p505) target = $region72
        $region71: #{tpu_custom_call.1} parent=63 // pred_region
          %509 = dma.done [#allocation6], 2048
        $region72: #{tpu_custom_call.1} parent=63 // pred_fallthru
          _
        // Predicated region
        $region73: #{tpu_custom_call.1} parent=63 // pred_check
          %p510 = pneg %p101
        $region74: #{tpu_custom_call.1} parent=63 // pred_check_branch
          %512 = sbr.rel (%p510) target = $region76
        $region75: #{tpu_custom_call.1} parent=63 // pred_region
          %514 = dma.done [#allocation6], 32
        $region76: #{tpu_custom_call.1} parent=63 // pred_fallthru
          _
        // Predicated region
        $region77: #{tpu_custom_call.1} parent=63 // pred_check
          %p515 = pneg %p122
        $region78: #{tpu_custom_call.1} parent=63 // pred_check_branch
          %517 = sbr.rel (%p515) target = $region80
        $region79: #{tpu_custom_call.1} parent=63 // pred_region
          %519 = dma.done [#allocation9], 6144
        $region80: #{tpu_custom_call.1} parent=63 // pred_fallthru
          _
        // Predicated region
        $region81: #{tpu_custom_call.1} parent=63 // pred_check
          %p520 = pneg %p143
        $region82: #{tpu_custom_call.1} parent=63 // pred_check_branch
          %522 = sbr.rel (%p520) target = $region84
        $region83: #{tpu_custom_call.1} parent=63 // pred_region
          %524 = dma.done [#allocation9], 48
        $region84: #{tpu_custom_call.1} parent=63 // pred_fallthru
          _
        // Predicated region
        $region85: #{tpu_custom_call.1} parent=63 // pred_check
          %p525 = pneg %p164
        $region86: #{tpu_custom_call.1} parent=63 // pred_check_branch
          %527 = sbr.rel (%p525) target = $region88
        $region87: #{tpu_custom_call.1} parent=63 // pred_region
          %529 = dma.done [#allocation12], 12288
        $region88: #{tpu_custom_call.1} parent=63 // pred_fallthru
          _
        // Predicated region
        $region89: #{tpu_custom_call.1} parent=63 // pred_check
          %p530 = pneg %p206
        $region90: #{tpu_custom_call.1} parent=63 // pred_check_branch
          %532 = sbr.rel (%p530) target = $region92
        $region91: #{tpu_custom_call.1} parent=63 // pred_region
          %534 = dma.done [#allocation12], 4096
        $region92: #{tpu_custom_call.1} parent=63 // pred_fallthru
          _
        // Predicated region
        $region93: #{tpu_custom_call.1} parent=63 // pred_check
          %p535 = pneg %p248
        $region94: #{tpu_custom_call.1} parent=63 // pred_check_branch
          %537 = sbr.rel (%p535) target = $region96
        $region95: #{tpu_custom_call.1} parent=63 // pred_region
          %539 = dma.done [#allocation15], 1024
        $region96: #{tpu_custom_call.1} parent=63 // pred_fallthru
          _
        %s540 = sand.u32 %s46, 1
        %s541 = scalar_lea.sflag [#allocation3], %s540
        %s542 = sand.u32 %s46, 1
        %s543 = smul.addr %s542, 4
        %s544 = scalar_lea.vmem [#allocation2], %s543
        %p545 = pneg %p59
        %p546 = pneg %p56
        %p547 = pneg %p80
        %p548 = pneg %p77
        %p549 = pneg %p101
        %p550 = pneg %p98
        %p551 = pneg %p122
        %p552 = pneg %p119
        %p553 = pneg %p143
        %p554 = pneg %p140
        %p555 = pneg %p164
        %p556 = pneg %p161
        %p557 = pneg %p185
        %p558 = pneg %p182
        %p559 = pneg %p206
        %p560 = pneg %p203
        %p561 = pneg %p227
        %p562 = pneg %p224
        %p563 = pneg %p248
        %p564 = pneg %p245
        %p565 = pneg %p269
        %p566 = pneg %p266
        %p567 = pneg %p295
        %p568 = pneg %p292
        %s569 = sand.u32 %s282, 1
        %s570 = scalar_lea.sflag [#allocation4], %s569
        %s571 = sand.u32 %s282, 1
        %s572 = smul.addr %s571, 8
        %s573 = scalar_lea.vmem [#allocation16], %s572
        %p574 = pneg %p321
        %p575 = pneg %p318
        %s576 = sand.u32 %s38, 1
        %s577 = scalar_lea.sflag [#allocation18], %s576
        %s578 = sand.u32 %s308, 1
        %s579 = smul.addr %s578, 8
        %s580 = scalar_lea.vmem [#allocation17], %s579
        %p581 = pneg %p347
        %p582 = pneg %p344
        %s583 = sand.u32 %s38, 1
        %s584 = scalar_lea.sflag [#allocation18], %s583
        %s585 = sand.u32 %s334, 1
        %s586 = smul.addr %s585, 8
        %s587 = scalar_lea.vmem [#allocation19], %s586
        %v588 = vld [vmem:[%s499] sm:$0xf]
        %v589 = vld [vmem:[#allocation5] sm:$0xff]
        %v590 = vld [vmem:[#allocation5 + $0x8] sm:$0xff]
        %v591 = vld [vmem:[#allocation5 + $0x10] sm:$0xff]
        %v592 = vld [vmem:[#allocation5 + $0x18] sm:$0xff]
        %v593 = vld [vmem:[#allocation5 + $0x20] sm:$0xff]
        %v594 = vld [vmem:[#allocation5 + $0x28] sm:$0xff]
        %v595 = vld [vmem:[#allocation5 + $0x30] sm:$0xff]
        %v596 = vld [vmem:[#allocation5 + $0x38] sm:$0xff]
        %v597 = vld [vmem:[#allocation5 + $0x40] sm:$0xff]
        %v598 = vld [vmem:[#allocation5 + $0x48] sm:$0xff]
        %v599 = vld [vmem:[#allocation5 + $0x50] sm:$0xff]
        %v600 = vld [vmem:[#allocation5 + $0x58] sm:$0xff]
        %v601 = vld [vmem:[#allocation5 + $0x60] sm:$0xff]
        %v602 = vld [vmem:[#allocation5 + $0x68] sm:$0xff]
        %v603 = vld [vmem:[#allocation5 + $0x70] sm:$0xff]
        %v604 = vld [vmem:[#allocation5 + $0x78] sm:$0xff]
        %v605 = vld [vmem:[#allocation7] sm:$0x3]
        %v607 = vperm.slane %v605, 0
        %v608 = vperm.slane %v605, 1
        %v627 = vunpack.c.l.b16 %v589
        %v628 = vunpack.c.h.b16 %v589
        %v629 = vunpack.c.l.b16 %v590
        %v630 = vunpack.c.h.b16 %v590
        %v631 = vunpack.c.l.b16 %v591
        %v632 = vunpack.c.h.b16 %v591
        %v633 = vunpack.c.l.b16 %v592
        %v634 = vunpack.c.h.b16 %v592
        %v635 = vunpack.c.l.b16 %v593
        %v636 = vunpack.c.h.b16 %v593
        %v637 = vunpack.c.l.b16 %v594
        %v638 = vunpack.c.h.b16 %v594
        %v639 = vunpack.c.l.b16 %v595
        %v640 = vunpack.c.h.b16 %v595
        %v641 = vunpack.c.l.b16 %v596
        %v642 = vunpack.c.h.b16 %v596
        %v643 = vunpack.c.l.b16 %v597
        %v644 = vunpack.c.h.b16 %v597
        %v645 = vunpack.c.l.b16 %v598
        %v646 = vunpack.c.h.b16 %v598
        %v647 = vunpack.c.l.b16 %v599
        %v648 = vunpack.c.h.b16 %v599
        %v649 = vunpack.c.l.b16 %v600
        %v650 = vunpack.c.h.b16 %v600
        %v651 = vunpack.c.l.b16 %v601
        %v652 = vunpack.c.h.b16 %v601
        %v653 = vunpack.c.l.b16 %v602
        %v654 = vunpack.c.h.b16 %v602
        %v655 = vunpack.c.l.b16 %v603
        %v656 = vunpack.c.h.b16 %v603
        %v657 = vunpack.c.l.b16 %v604
        %v658 = vunpack.c.h.b16 %v604
        %v659 = vpack.c.b16 %v629, %v627
        %v660 = vpack.c.b16 %v630, %v628
        %v661 = vpack.c.b16 %v633, %v631
        %v662 = vpack.c.b16 %v634, %v632
        %v663 = vpack.c.b16 %v637, %v635
        %v664 = vpack.c.b16 %v638, %v636
        %v665 = vpack.c.b16 %v641, %v639
        %v666 = vpack.c.b16 %v642, %v640
        %v667 = vpack.c.b16 %v645, %v643
        %v668 = vpack.c.b16 %v646, %v644
        %v669 = vpack.c.b16 %v649, %v647
        %v670 = vpack.c.b16 %v650, %v648
        %v671 = vpack.c.b16 %v653, %v651
        %v672 = vpack.c.b16 %v654, %v652
        %v673 = vpack.c.b16 %v657, %v655
        %v674 = vpack.c.b16 %v658, %v656
        %691 = vmatpush.bf16.msra.mxu0 %v673
        %692 = vmatpush.bf16.msra.mxu0 %v671
        %693 = vmatpush.bf16.msra.mxu0 %v669
        %694 = vmatpush.bf16.msra.mxu0 %v667
        %695 = vmatpush.bf16.msra.mxu0 %v665
        %696 = vmatpush.bf16.msra.mxu0 %v663
        %697 = vmatpush.bf16.msra.mxu0 %v661
        %698 = vmatpush.bf16.msra.mxu0 %v659
        %699 = vmatmul.bf16.gmra.mxu0 %v588
        %v700 = vpop.f32.mrf.mxu0
        %v701 = vadd.f32 %v607, %v700
        %v702 = vpop.f32.mrf.mxu0
        %703 = vdwg.mxu0
        %704 = vmatpush.bf16.msra.mxu0 %v674
        %705 = vmatpush.bf16.msra.mxu0 %v672
        %706 = vmatpush.bf16.msra.mxu0 %v670
        %707 = vmatpush.bf16.msra.mxu0 %v668
        %708 = vmatpush.bf16.msra.mxu0 %v666
        %709 = vmatpush.bf16.msra.mxu0 %v664
        %710 = vmatpush.bf16.msra.mxu0 %v662
        %711 = vmatpush.bf16.msra.mxu0 %v660
        %712 = vmatmul.bf16.gmra.mxu0 %v588
        %v713 = vpop.f32.mrf.mxu0
        %v714 = vadd.f32 %v608, %v713
        %v715 = vpop.f32.mrf.mxu0
        %716 = vdwg.mxu0
        %vm717 = vcmp.gt.f32.partialorder %v701, 0.0
        %vm718 = vcmp.gt.f32.partialorder %v714, 0.0
        %v719 = vmul.f32 %v701, 0.05
        %v720 = vmul.f32 %v714, 0.05
        %v721 = vsel %vm717, %v701, %v719
        %v722 = vsel %vm718, %v714, %v720
        %v723 = vpack.c.bf16 %v721, %v721
        %v724 = vpack.c.bf16 %v722, %v722
        %v725 = vld [vmem:[#allocation8] sm:$0xff]
        %v726 = vld [vmem:[#allocation8 + $0x8] sm:$0xf]
        %v727 = vld [vmem:[#allocation8 + $0xc] sm:$0xff]
        %v728 = vld [vmem:[#allocation8 + $0x14] sm:$0xf]
        %v729 = vld [vmem:[#allocation8 + $0x18] sm:$0xff]
        %v730 = vld [vmem:[#allocation8 + $0x20] sm:$0xf]
        %v731 = vld [vmem:[#allocation8 + $0x24] sm:$0xff]
        %v732 = vld [vmem:[#allocation8 + $0x2c] sm:$0xf]
        %v733 = vld [vmem:[#allocation8 + $0x30] sm:$0xff]
        %v734 = vld [vmem:[#allocation8 + $0x38] sm:$0xf]
        %v735 = vld [vmem:[#allocation8 + $0x3c] sm:$0xff]
        %v736 = vld [vmem:[#allocation8 + $0x44] sm:$0xf]
        %v737 = vld [vmem:[#allocation8 + $0x48] sm:$0xff]
        %v738 = vld [vmem:[#allocation8 + $0x50] sm:$0xf]
        %v739 = vld [vmem:[#allocation8 + $0x54] sm:$0xff]
        %v740 = vld [vmem:[#allocation8 + $0x5c] sm:$0xf]
        %v741 = vld [vmem:[#allocation8 + $0x60] sm:$0xff]
        %v742 = vld [vmem:[#allocation8 + $0x68] sm:$0xf]
        %v743 = vld [vmem:[#allocation8 + $0x6c] sm:$0xff]
        %v744 = vld [vmem:[#allocation8 + $0x74] sm:$0xf]
        %v745 = vld [vmem:[#allocation8 + $0x78] sm:$0xff]
        %v746 = vld [vmem:[#allocation8 + $0x80] sm:$0xf]
        %v747 = vld [vmem:[#allocation8 + $0x84] sm:$0xff]
        %v748 = vld [vmem:[#allocation8 + $0x8c] sm:$0xf]
        %v749 = vld [vmem:[#allocation8 + $0x90] sm:$0xff]
        %v750 = vld [vmem:[#allocation8 + $0x98] sm:$0xf]
        %v751 = vld [vmem:[#allocation8 + $0x9c] sm:$0xff]
        %v752 = vld [vmem:[#allocation8 + $0xa4] sm:$0xf]
        %v753 = vld [vmem:[#allocation8 + $0xa8] sm:$0xff]
        %v754 = vld [vmem:[#allocation8 + $0xb0] sm:$0xf]
        %v755 = vld [vmem:[#allocation8 + $0xb4] sm:$0xff]
        %v756 = vld [vmem:[#allocation8 + $0xbc] sm:$0xf]
        %v757 = vld [vmem:[#allocation8 + $0xc0] sm:$0xff]
        %v758 = vld [vmem:[#allocation8 + $0xc8] sm:$0xf]
        %v759 = vld [vmem:[#allocation8 + $0xcc] sm:$0xff]
        %v760 = vld [vmem:[#allocation8 + $0xd4] sm:$0xf]
        %v761 = vld [vmem:[#allocation8 + $0xd8] sm:$0xff]
        %v762 = vld [vmem:[#allocation8 + $0xe0] sm:$0xf]
        %v763 = vld [vmem:[#allocation8 + $0xe4] sm:$0xff]
        %v764 = vld [vmem:[#allocation8 + $0xec] sm:$0xf]
        %v765 = vld [vmem:[#allocation8 + $0xf0] sm:$0xff]
        %v766 = vld [vmem:[#allocation8 + $0xf8] sm:$0xf]
        %v767 = vld [vmem:[#allocation8 + $0xfc] sm:$0xff]
        %v768 = vld [vmem:[#allocation8 + $0x104] sm:$0xf]
        %v769 = vld [vmem:[#allocation8 + $0x108] sm:$0xff]
        %v770 = vld [vmem:[#allocation8 + $0x110] sm:$0xf]
        %v771 = vld [vmem:[#allocation8 + $0x114] sm:$0xff]
        %v772 = vld [vmem:[#allocation8 + $0x11c] sm:$0xf]
        %v773 = vld [vmem:[#allocation8 + $0x120] sm:$0xff]
        %v774 = vld [vmem:[#allocation8 + $0x128] sm:$0xf]
        %v775 = vld [vmem:[#allocation8 + $0x12c] sm:$0xff]
        %v776 = vld [vmem:[#allocation8 + $0x134] sm:$0xf]
        %v777 = vld [vmem:[#allocation8 + $0x138] sm:$0xff]
        %v778 = vld [vmem:[#allocation8 + $0x140] sm:$0xf]
        %v779 = vld [vmem:[#allocation8 + $0x144] sm:$0xff]
        %v780 = vld [vmem:[#allocation8 + $0x14c] sm:$0xf]
        %v781 = vld [vmem:[#allocation8 + $0x150] sm:$0xff]
        %v782 = vld [vmem:[#allocation8 + $0x158] sm:$0xf]
        %v783 = vld [vmem:[#allocation8 + $0x15c] sm:$0xff]
        %v784 = vld [vmem:[#allocation8 + $0x164] sm:$0xf]
        %v785 = vld [vmem:[#allocation8 + $0x168] sm:$0xff]
        %v786 = vld [vmem:[#allocation8 + $0x170] sm:$0xf]
        %v787 = vld [vmem:[#allocation8 + $0x174] sm:$0xff]
        %v788 = vld [vmem:[#allocation8 + $0x17c] sm:$0xf]
        %v789 = vld [vmem:[#allocation10] sm:$0x7]
        %v791 = vperm.slane %v789, 0
        %v792 = vperm.slane %v789, 1
        %v793 = vperm.slane %v789, 2
        %v861 = vunpack.c.l.b16 %v725
        %v862 = vunpack.c.h.b16 %v725
        %v863 = vunpack.c.l.b16 %v726
        %v864 = vunpack.c.l.b16 %v727
        %v865 = vunpack.c.h.b16 %v727
        %v866 = vunpack.c.l.b16 %v728
        %v867 = vunpack.c.l.b16 %v729
        %v868 = vunpack.c.h.b16 %v729
        %v869 = vunpack.c.l.b16 %v730
        %v870 = vunpack.c.l.b16 %v731
        %v871 = vunpack.c.h.b16 %v731
        %v872 = vunpack.c.l.b16 %v732
        %v873 = vunpack.c.l.b16 %v733
        %v874 = vunpack.c.h.b16 %v733
        %v875 = vunpack.c.l.b16 %v734
        %v876 = vunpack.c.l.b16 %v735
        %v877 = vunpack.c.h.b16 %v735
        %v878 = vunpack.c.l.b16 %v736
        %v879 = vunpack.c.l.b16 %v737
        %v880 = vunpack.c.h.b16 %v737
        %v881 = vunpack.c.l.b16 %v738
        %v882 = vunpack.c.l.b16 %v739
        %v883 = vunpack.c.h.b16 %v739
        %v884 = vunpack.c.l.b16 %v740
        %v885 = vunpack.c.l.b16 %v741
        %v886 = vunpack.c.h.b16 %v741
        %v887 = vunpack.c.l.b16 %v742
        %v888 = vunpack.c.l.b16 %v743
        %v889 = vunpack.c.h.b16 %v743
        %v890 = vunpack.c.l.b16 %v744
        %v891 = vunpack.c.l.b16 %v745
        %v892 = vunpack.c.h.b16 %v745
        %v893 = vunpack.c.l.b16 %v746
        %v894 = vunpack.c.l.b16 %v747
        %v895 = vunpack.c.h.b16 %v747
        %v896 = vunpack.c.l.b16 %v748
        %v897 = vunpack.c.l.b16 %v749
        %v898 = vunpack.c.h.b16 %v749
        %v899 = vunpack.c.l.b16 %v750
        %v900 = vunpack.c.l.b16 %v751
        %v901 = vunpack.c.h.b16 %v751
        %v902 = vunpack.c.l.b16 %v752
        %v903 = vunpack.c.l.b16 %v753
        %v904 = vunpack.c.h.b16 %v753
        %v905 = vunpack.c.l.b16 %v754
        %v906 = vunpack.c.l.b16 %v755
        %v907 = vunpack.c.h.b16 %v755
        %v908 = vunpack.c.l.b16 %v756
        %v909 = vunpack.c.l.b16 %v757
        %v910 = vunpack.c.h.b16 %v757
        %v911 = vunpack.c.l.b16 %v758
        %v912 = vunpack.c.l.b16 %v759
        %v913 = vunpack.c.h.b16 %v759
        %v914 = vunpack.c.l.b16 %v760
        %v915 = vunpack.c.l.b16 %v761
        %v916 = vunpack.c.h.b16 %v761
        %v917 = vunpack.c.l.b16 %v762
        %v918 = vunpack.c.l.b16 %v763
        %v919 = vunpack.c.h.b16 %v763
        %v920 = vunpack.c.l.b16 %v764
        %v921 = vunpack.c.l.b16 %v765
        %v922 = vunpack.c.h.b16 %v765
        %v923 = vunpack.c.l.b16 %v766
        %v924 = vunpack.c.l.b16 %v767
        %v925 = vunpack.c.h.b16 %v767
        %v926 = vunpack.c.l.b16 %v768
        %v927 = vunpack.c.l.b16 %v769
        %v928 = vunpack.c.h.b16 %v769
        %v929 = vunpack.c.l.b16 %v770
        %v930 = vunpack.c.l.b16 %v771
        %v931 = vunpack.c.h.b16 %v771
        %v932 = vunpack.c.l.b16 %v772
        %v933 = vunpack.c.l.b16 %v773
        %v934 = vunpack.c.h.b16 %v773
        %v935 = vunpack.c.l.b16 %v774
        %v936 = vunpack.c.l.b16 %v775
        %v937 = vunpack.c.h.b16 %v775
        %v938 = vunpack.c.l.b16 %v776
        %v939 = vunpack.c.l.b16 %v777
        %v940 = vunpack.c.h.b16 %v777
        %v941 = vunpack.c.l.b16 %v778
        %v942 = vunpack.c.l.b16 %v779
        %v943 = vunpack.c.h.b16 %v779
        %v944 = vunpack.c.l.b16 %v780
        %v945 = vunpack.c.l.b16 %v781
        %v946 = vunpack.c.h.b16 %v781
        %v947 = vunpack.c.l.b16 %v782
        %v948 = vunpack.c.l.b16 %v783
        %v949 = vunpack.c.h.b16 %v783
        %v950 = vunpack.c.l.b16 %v784
        %v951 = vunpack.c.l.b16 %v785
        %v952 = vunpack.c.h.b16 %v785
        %v953 = vunpack.c.l.b16 %v786
        %v954 = vunpack.c.l.b16 %v787
        %v955 = vunpack.c.h.b16 %v787
        %v956 = vunpack.c.l.b16 %v788
        %v957 = vpack.c.b16 %v864, %v861
        %v958 = vpack.c.b16 %v865, %v862
        %v959 = vpack.c.b16 %v866, %v863
        %v960 = vpack.c.b16 %v870, %v867
        %v961 = vpack.c.b16 %v871, %v868
        %v962 = vpack.c.b16 %v872, %v869
        %v963 = vpack.c.b16 %v876, %v873
        %v964 = vpack.c.b16 %v877, %v874
        %v965 = vpack.c.b16 %v878, %v875
        %v966 = vpack.c.b16 %v882, %v879
        %v967 = vpack.c.b16 %v883, %v880
        %v968 = vpack.c.b16 %v884, %v881
        %v969 = vpack.c.b16 %v888, %v885
        %v970 = vpack.c.b16 %v889, %v886
        %v971 = vpack.c.b16 %v890, %v887
        %v972 = vpack.c.b16 %v894, %v891
        %v973 = vpack.c.b16 %v895, %v892
        %v974 = vpack.c.b16 %v896, %v893
        %v975 = vpack.c.b16 %v900, %v897
        %v976 = vpack.c.b16 %v901, %v898
        %v977 = vpack.c.b16 %v902, %v899
        %v978 = vpack.c.b16 %v906, %v903
        %v979 = vpack.c.b16 %v907, %v904
        %v980 = vpack.c.b16 %v908, %v905
        %v981 = vpack.c.b16 %v912, %v909
        %v982 = vpack.c.b16 %v913, %v910
        %v983 = vpack.c.b16 %v914, %v911
        %v984 = vpack.c.b16 %v918, %v915
        %v985 = vpack.c.b16 %v919, %v916
        %v986 = vpack.c.b16 %v920, %v917
        %v987 = vpack.c.b16 %v924, %v921
        %v988 = vpack.c.b16 %v925, %v922
        %v989 = vpack.c.b16 %v926, %v923
        %v990 = vpack.c.b16 %v930, %v927
        %v991 = vpack.c.b16 %v931, %v928
        %v992 = vpack.c.b16 %v932, %v929
        %v993 = vpack.c.b16 %v936, %v933
        %v994 = vpack.c.b16 %v937, %v934
        %v995 = vpack.c.b16 %v938, %v935
        %v996 = vpack.c.b16 %v942, %v939
        %v997 = vpack.c.b16 %v943, %v940
        %v998 = vpack.c.b16 %v944, %v941
        %v999 = vpack.c.b16 %v948, %v945
        %v1000 = vpack.c.b16 %v949, %v946
        %v1001 = vpack.c.b16 %v950, %v947
        %v1002 = vpack.c.b16 %v954, %v951
        %v1003 = vpack.c.b16 %v955, %v952
        %v1004 = vpack.c.b16 %v956, %v953
        %1053 = vmatpush.bf16.msra.mxu0 %v978
        %1054 = vmatpush.bf16.msra.mxu0 %v975
        %1055 = vmatpush.bf16.msra.mxu0 %v972
        %1056 = vmatpush.bf16.msra.mxu0 %v969
        %1057 = vmatpush.bf16.msra.mxu0 %v966
        %1058 = vmatpush.bf16.msra.mxu0 %v963
        %1059 = vmatpush.bf16.msra.mxu0 %v960
        %1060 = vmatpush.bf16.msra.mxu0 %v957
        %1061 = vmatmul.bf16.gmra.mxu0 %v723
        %v1062 = vpop.f32.mrf.mxu0
        %v1063 = vadd.f32 %v791, %v1062
        %v1064 = vpop.f32.mrf.mxu0
        %1065 = vdwg.mxu0
        %1066 = vmatpush.bf16.msra.mxu0 %v1002
        %1067 = vmatpush.bf16.msra.mxu0 %v999
        %1068 = vmatpush.bf16.msra.mxu0 %v996
        %1069 = vmatpush.bf16.msra.mxu0 %v993
        %1070 = vmatpush.bf16.msra.mxu0 %v990
        %1071 = vmatpush.bf16.msra.mxu0 %v987
        %1072 = vmatpush.bf16.msra.mxu0 %v984
        %1073 = vmatpush.bf16.msra.mxu0 %v981
        %1074 = vmatmul.bf16.gmra.mxu0 %v724
        %v1075 = vpop.f32.mrf.mxu0
        %v1076 = vadd.f32 %v1063, %v1075
        %v1077 = vpop.f32.mrf.mxu0
        %1078 = vdwg.mxu0
        %1079 = vmatpush.bf16.msra.mxu0 %v979
        %1080 = vmatpush.bf16.msra.mxu0 %v976
        %1081 = vmatpush.bf16.msra.mxu0 %v973
        %1082 = vmatpush.bf16.msra.mxu0 %v970
        %1083 = vmatpush.bf16.msra.mxu0 %v967
        %1084 = vmatpush.bf16.msra.mxu0 %v964
        %1085 = vmatpush.bf16.msra.mxu0 %v961
        %1086 = vmatpush.bf16.msra.mxu0 %v958
        %1087 = vmatmul.bf16.gmra.mxu0 %v723
        %v1088 = vpop.f32.mrf.mxu0
        %v1089 = vadd.f32 %v792, %v1088
        %v1090 = vpop.f32.mrf.mxu0
        %1091 = vdwg.mxu0
        %1092 = vmatpush.bf16.msra.mxu0 %v1003
        %1093 = vmatpush.bf16.msra.mxu0 %v1000
        %1094 = vmatpush.bf16.msra.mxu0 %v997
        %1095 = vmatpush.bf16.msra.mxu0 %v994
        %1096 = vmatpush.bf16.msra.mxu0 %v991
        %1097 = vmatpush.bf16.msra.mxu0 %v988
        %1098 = vmatpush.bf16.msra.mxu0 %v985
        %1099 = vmatpush.bf16.msra.mxu0 %v982
        %1100 = vmatmul.bf16.gmra.mxu0 %v724
        %v1101 = vpop.f32.mrf.mxu0
        %v1102 = vadd.f32 %v1089, %v1101
        %v1103 = vpop.f32.mrf.mxu0
        %1104 = vdwg.mxu0
        %1105 = vmatpush.bf16.msra.mxu0 %v980
        %1106 = vmatpush.bf16.msra.mxu0 %v977
        %1107 = vmatpush.bf16.msra.mxu0 %v974
        %1108 = vmatpush.bf16.msra.mxu0 %v971
        %1109 = vmatpush.bf16.msra.mxu0 %v968
        %1110 = vmatpush.bf16.msra.mxu0 %v965
        %1111 = vmatpush.bf16.msra.mxu0 %v962
        %1112 = vmatpush.bf16.msra.mxu0 %v959
        %1113 = vmatmul.bf16.gmra.mxu0 %v723
        %v1114 = vpop.f32.mrf.mxu0
        %v1115 = vadd.f32 %v793, %v1114
        %v1116 = vpop.f32.mrf.mxu0
        %1117 = vdwg.mxu0
        %1118 = vmatpush.bf16.msra.mxu0 %v1004
        %1119 = vmatpush.bf16.msra.mxu0 %v1001
        %1120 = vmatpush.bf16.msra.mxu0 %v998
        %1121 = vmatpush.bf16.msra.mxu0 %v995
        %1122 = vmatpush.bf16.msra.mxu0 %v992
        %1123 = vmatpush.bf16.msra.mxu0 %v989
        %1124 = vmatpush.bf16.msra.mxu0 %v986
        %1125 = vmatpush.bf16.msra.mxu0 %v983
        %1126 = vmatmul.bf16.gmra.mxu0 %v724
        %v1127 = vpop.f32.mrf.mxu0
        %v1128 = vadd.f32 %v1115, %v1127
        %v1129 = vpop.f32.mrf.mxu0
        %1130 = vdwg.mxu0
        %vm1131 = vcmp.gt.f32.partialorder %v1076, 0.0
        %vm1132 = vcmp.gt.f32.partialorder %v1102, 0.0
        %vm1133 = vcmp.gt.f32.partialorder %v1128, 0.0
        %v1134 = vmul.f32 %v1076, 0.05
        %v1135 = vmul.f32 %v1102, 0.05
        %v1136 = vmul.f32 %v1128, 0.05
        %v1137 = vsel %vm1131, %v1076, %v1134
        %v1138 = vsel %vm1132, %v1102, %v1135
        %v1139 = vsel %vm1133, %v1128, %v1136
        %v1140 = vpack.c.bf16 %v1137, %v1137
        %v1141 = vpack.c.bf16 %v1138, %v1138
        %v1142 = vpack.c.bf16 %v1139, %v1139
        %v1143 = vld [vmem:[#allocation11] sm:$0xff]
        %v1144 = vld [vmem:[#allocation11 + $0x8] sm:$0xff]
        %v1145 = vld [vmem:[#allocation11 + $0x10] sm:$0xff]
        %v1146 = vld [vmem:[#allocation11 + $0x18] sm:$0xff]
        %v1147 = vld [vmem:[#allocation11 + $0x20] sm:$0xff]
        %v1148 = vld [vmem:[#allocation11 + $0x28] sm:$0xff]
        %v1149 = vld [vmem:[#allocation11 + $0x30] sm:$0xff]
        %v1150 = vld [vmem:[#allocation11 + $0x38] sm:$0xff]
        %v1151 = vld [vmem:[#allocation11 + $0x40] sm:$0xff]
        %v1152 = vld [vmem:[#allocation11 + $0x48] sm:$0xff]
        %v1153 = vld [vmem:[#allocation11 + $0x50] sm:$0xff]
        %v1154 = vld [vmem:[#allocation11 + $0x58] sm:$0xff]
        %v1155 = vld [vmem:[#allocation11 + $0x60] sm:$0xff]
        %v1156 = vld [vmem:[#allocation11 + $0x68] sm:$0xff]
        %v1157 = vld [vmem:[#allocation11 + $0x70] sm:$0xff]
        %v1158 = vld [vmem:[#allocation11 + $0x78] sm:$0xff]
        %v1159 = vld [vmem:[#allocation11 + $0x80] sm:$0xff]
        %v1160 = vld [vmem:[#allocation11 + $0x88] sm:$0xff]
        %v1161 = vld [vmem:[#allocation11 + $0x90] sm:$0xff]
        %v1162 = vld [vmem:[#allocation11 + $0x98] sm:$0xff]
        %v1163 = vld [vmem:[#allocation11 + $0xa0] sm:$0xff]
        %v1164 = vld [vmem:[#allocation11 + $0xa8] sm:$0xff]
        %v1165 = vld [vmem:[#allocation11 + $0xb0] sm:$0xff]
        %v1166 = vld [vmem:[#allocation11 + $0xb8] sm:$0xff]
        %v1167 = vld [vmem:[#allocation11 + $0xc0] sm:$0xff]
        %v1168 = vld [vmem:[#allocation11 + $0xc8] sm:$0xff]
        %v1169 = vld [vmem:[#allocation11 + $0xd0] sm:$0xff]
        %v1170 = vld [vmem:[#allocation11 + $0xd8] sm:$0xff]
        %v1171 = vld [vmem:[#allocation11 + $0xe0] sm:$0xff]
        %v1172 = vld [vmem:[#allocation11 + $0xe8] sm:$0xff]
        %v1173 = vld [vmem:[#allocation11 + $0xf0] sm:$0xff]
        %v1174 = vld [vmem:[#allocation11 + $0xf8] sm:$0xff]
        %v1175 = vld [vmem:[#allocation11 + $0x100] sm:$0xff]
        %v1176 = vld [vmem:[#allocation11 + $0x108] sm:$0xff]
        %v1177 = vld [vmem:[#allocation11 + $0x110] sm:$0xff]
        %v1178 = vld [vmem:[#allocation11 + $0x118] sm:$0xff]
        %v1179 = vld [vmem:[#allocation11 + $0x120] sm:$0xff]
        %v1180 = vld [vmem:[#allocation11 + $0x128] sm:$0xff]
        %v1181 = vld [vmem:[#allocation11 + $0x130] sm:$0xff]
        %v1182 = vld [vmem:[#allocation11 + $0x138] sm:$0xff]
        %v1183 = vld [vmem:[#allocation11 + $0x140] sm:$0xff]
        %v1184 = vld [vmem:[#allocation11 + $0x148] sm:$0xff]
        %v1185 = vld [vmem:[#allocation11 + $0x150] sm:$0xff]
        %v1186 = vld [vmem:[#allocation11 + $0x158] sm:$0xff]
        %v1187 = vld [vmem:[#allocation11 + $0x160] sm:$0xff]
        %v1188 = vld [vmem:[#allocation11 + $0x168] sm:$0xff]
        %v1189 = vld [vmem:[#allocation11 + $0x170] sm:$0xff]
        %v1190 = vld [vmem:[#allocation11 + $0x178] sm:$0xff]
        %v1191 = vld [vmem:[#allocation11 + $0x180] sm:$0xff]
        %v1192 = vld [vmem:[#allocation11 + $0x188] sm:$0xff]
        %v1193 = vld [vmem:[#allocation11 + $0x190] sm:$0xff]
        %v1194 = vld [vmem:[#allocation11 + $0x198] sm:$0xff]
        %v1195 = vld [vmem:[#allocation11 + $0x1a0] sm:$0xff]
        %v1196 = vld [vmem:[#allocation11 + $0x1a8] sm:$0xff]
        %v1197 = vld [vmem:[#allocation11 + $0x1b0] sm:$0xff]
        %v1198 = vld [vmem:[#allocation11 + $0x1b8] sm:$0xff]
        %v1199 = vld [vmem:[#allocation11 + $0x1c0] sm:$0xff]
        %v1200 = vld [vmem:[#allocation11 + $0x1c8] sm:$0xff]
        %v1201 = vld [vmem:[#allocation11 + $0x1d0] sm:$0xff]
        %v1202 = vld [vmem:[#allocation11 + $0x1d8] sm:$0xff]
        %v1203 = vld [vmem:[#allocation11 + $0x1e0] sm:$0xff]
        %v1204 = vld [vmem:[#allocation11 + $0x1e8] sm:$0xff]
        %v1205 = vld [vmem:[#allocation11 + $0x1f0] sm:$0xff]
        %v1206 = vld [vmem:[#allocation11 + $0x1f8] sm:$0xff]
        %v1207 = vld [vmem:[#allocation11 + $0x200] sm:$0xff]
        %v1208 = vld [vmem:[#allocation11 + $0x208] sm:$0xff]
        %v1209 = vld [vmem:[#allocation11 + $0x210] sm:$0xff]
        %v1210 = vld [vmem:[#allocation11 + $0x218] sm:$0xff]
        %v1211 = vld [vmem:[#allocation11 + $0x220] sm:$0xff]
        %v1212 = vld [vmem:[#allocation11 + $0x228] sm:$0xff]
        %v1213 = vld [vmem:[#allocation11 + $0x230] sm:$0xff]
        %v1214 = vld [vmem:[#allocation11 + $0x238] sm:$0xff]
        %v1215 = vld [vmem:[#allocation11 + $0x240] sm:$0xff]
        %v1216 = vld [vmem:[#allocation11 + $0x248] sm:$0xff]
        %v1217 = vld [vmem:[#allocation11 + $0x250] sm:$0xff]
        %v1218 = vld [vmem:[#allocation11 + $0x258] sm:$0xff]
        %v1219 = vld [vmem:[#allocation11 + $0x260] sm:$0xff]
        %v1220 = vld [vmem:[#allocation11 + $0x268] sm:$0xff]
        %v1221 = vld [vmem:[#allocation11 + $0x270] sm:$0xff]
        %v1222 = vld [vmem:[#allocation11 + $0x278] sm:$0xff]
        %v1223 = vld [vmem:[#allocation11 + $0x280] sm:$0xff]
        %v1224 = vld [vmem:[#allocation11 + $0x288] sm:$0xff]
        %v1225 = vld [vmem:[#allocation11 + $0x290] sm:$0xff]
        %v1226 = vld [vmem:[#allocation11 + $0x298] sm:$0xff]
        %v1227 = vld [vmem:[#allocation11 + $0x2a0] sm:$0xff]
        %v1228 = vld [vmem:[#allocation11 + $0x2a8] sm:$0xff]
        %v1229 = vld [vmem:[#allocation11 + $0x2b0] sm:$0xff]
        %v1230 = vld [vmem:[#allocation11 + $0x2b8] sm:$0xff]
        %v1231 = vld [vmem:[#allocation11 + $0x2c0] sm:$0xff]
        %v1232 = vld [vmem:[#allocation11 + $0x2c8] sm:$0xff]
        %v1233 = vld [vmem:[#allocation11 + $0x2d0] sm:$0xff]
        %v1234 = vld [vmem:[#allocation11 + $0x2d8] sm:$0xff]
        %v1235 = vld [vmem:[#allocation11 + $0x2e0] sm:$0xff]
        %v1236 = vld [vmem:[#allocation11 + $0x2e8] sm:$0xff]
        %v1237 = vld [vmem:[#allocation11 + $0x2f0] sm:$0xff]
        %v1238 = vld [vmem:[#allocation11 + $0x2f8] sm:$0xff]
        %v1239 = vld [vmem:[%s6] sm:$0xf]
        %v1241 = vperm.slane %v1239, 0
        %v1242 = vperm.slane %v1239, 1
        %v1243 = vperm.slane %v1239, 2
        %v1244 = vperm.slane %v1239, 3
        %v1345 = vunpack.c.l.b16 %v1143
        %v1346 = vunpack.c.h.b16 %v1143
        %v1347 = vunpack.c.l.b16 %v1144
        %v1348 = vunpack.c.h.b16 %v1144
        %v1349 = vunpack.c.l.b16 %v1145
        %v1350 = vunpack.c.h.b16 %v1145
        %v1351 = vunpack.c.l.b16 %v1146
        %v1352 = vunpack.c.h.b16 %v1146
        %v1353 = vunpack.c.l.b16 %v1147
        %v1354 = vunpack.c.h.b16 %v1147
        %v1355 = vunpack.c.l.b16 %v1148
        %v1356 = vunpack.c.h.b16 %v1148
        %v1357 = vunpack.c.l.b16 %v1149
        %v1358 = vunpack.c.h.b16 %v1149
        %v1359 = vunpack.c.l.b16 %v1150
        %v1360 = vunpack.c.h.b16 %v1150
        %v1361 = vunpack.c.l.b16 %v1151
        %v1362 = vunpack.c.h.b16 %v1151
        %v1363 = vunpack.c.l.b16 %v1152
        %v1364 = vunpack.c.h.b16 %v1152
        %v1365 = vunpack.c.l.b16 %v1153
        %v1366 = vunpack.c.h.b16 %v1153
        %v1367 = vunpack.c.l.b16 %v1154
        %v1368 = vunpack.c.h.b16 %v1154
        %v1369 = vunpack.c.l.b16 %v1155
        %v1370 = vunpack.c.h.b16 %v1155
        %v1371 = vunpack.c.l.b16 %v1156
        %v1372 = vunpack.c.h.b16 %v1156
        %v1373 = vunpack.c.l.b16 %v1157
        %v1374 = vunpack.c.h.b16 %v1157
        %v1375 = vunpack.c.l.b16 %v1158
        %v1376 = vunpack.c.h.b16 %v1158
        %v1377 = vunpack.c.l.b16 %v1159
        %v1378 = vunpack.c.h.b16 %v1159
        %v1379 = vunpack.c.l.b16 %v1160
        %v1380 = vunpack.c.h.b16 %v1160
        %v1381 = vunpack.c.l.b16 %v1161
        %v1382 = vunpack.c.h.b16 %v1161
        %v1383 = vunpack.c.l.b16 %v1162
        %v1384 = vunpack.c.h.b16 %v1162
        %v1385 = vunpack.c.l.b16 %v1163
        %v1386 = vunpack.c.h.b16 %v1163
        %v1387 = vunpack.c.l.b16 %v1164
        %v1388 = vunpack.c.h.b16 %v1164
        %v1389 = vunpack.c.l.b16 %v1165
        %v1390 = vunpack.c.h.b16 %v1165
        %v1391 = vunpack.c.l.b16 %v1166
        %v1392 = vunpack.c.h.b16 %v1166
        %v1393 = vunpack.c.l.b16 %v1167
        %v1394 = vunpack.c.h.b16 %v1167
        %v1395 = vunpack.c.l.b16 %v1168
        %v1396 = vunpack.c.h.b16 %v1168
        %v1397 = vunpack.c.l.b16 %v1169
        %v1398 = vunpack.c.h.b16 %v1169
        %v1399 = vunpack.c.l.b16 %v1170
        %v1400 = vunpack.c.h.b16 %v1170
        %v1401 = vunpack.c.l.b16 %v1171
        %v1402 = vunpack.c.h.b16 %v1171
        %v1403 = vunpack.c.l.b16 %v1172
        %v1404 = vunpack.c.h.b16 %v1172
        %v1405 = vunpack.c.l.b16 %v1173
        %v1406 = vunpack.c.h.b16 %v1173
        %v1407 = vunpack.c.l.b16 %v1174
        %v1408 = vunpack.c.h.b16 %v1174
        %v1409 = vunpack.c.l.b16 %v1175
        %v1410 = vunpack.c.h.b16 %v1175
        %v1411 = vunpack.c.l.b16 %v1176
        %v1412 = vunpack.c.h.b16 %v1176
        %v1413 = vunpack.c.l.b16 %v1177
        %v1414 = vunpack.c.h.b16 %v1177
        %v1415 = vunpack.c.l.b16 %v1178
        %v1416 = vunpack.c.h.b16 %v1178
        %v1417 = vunpack.c.l.b16 %v1179
        %v1418 = vunpack.c.h.b16 %v1179
        %v1419 = vunpack.c.l.b16 %v1180
        %v1420 = vunpack.c.h.b16 %v1180
        %v1421 = vunpack.c.l.b16 %v1181
        %v1422 = vunpack.c.h.b16 %v1181
        %v1423 = vunpack.c.l.b16 %v1182
        %v1424 = vunpack.c.h.b16 %v1182
        %v1425 = vunpack.c.l.b16 %v1183
        %v1426 = vunpack.c.h.b16 %v1183
        %v1427 = vunpack.c.l.b16 %v1184
        %v1428 = vunpack.c.h.b16 %v1184
        %v1429 = vunpack.c.l.b16 %v1185
        %v1430 = vunpack.c.h.b16 %v1185
        %v1431 = vunpack.c.l.b16 %v1186
        %v1432 = vunpack.c.h.b16 %v1186
        %v1433 = vunpack.c.l.b16 %v1187
        %v1434 = vunpack.c.h.b16 %v1187
        %v1435 = vunpack.c.l.b16 %v1188
        %v1436 = vunpack.c.h.b16 %v1188
        %v1437 = vunpack.c.l.b16 %v1189
        %v1438 = vunpack.c.h.b16 %v1189
        %v1439 = vunpack.c.l.b16 %v1190
        %v1440 = vunpack.c.h.b16 %v1190
        %v1441 = vunpack.c.l.b16 %v1191
        %v1442 = vunpack.c.h.b16 %v1191
        %v1443 = vunpack.c.l.b16 %v1192
        %v1444 = vunpack.c.h.b16 %v1192
        %v1445 = vunpack.c.l.b16 %v1193
        %v1446 = vunpack.c.h.b16 %v1193
        %v1447 = vunpack.c.l.b16 %v1194
        %v1448 = vunpack.c.h.b16 %v1194
        %v1449 = vunpack.c.l.b16 %v1195
        %v1450 = vunpack.c.h.b16 %v1195
        %v1451 = vunpack.c.l.b16 %v1196
        %v1452 = vunpack.c.h.b16 %v1196
        %v1453 = vunpack.c.l.b16 %v1197
        %v1454 = vunpack.c.h.b16 %v1197
        %v1455 = vunpack.c.l.b16 %v1198
        %v1456 = vunpack.c.h.b16 %v1198
        %v1457 = vunpack.c.l.b16 %v1199
        %v1458 = vunpack.c.h.b16 %v1199
        %v1459 = vunpack.c.l.b16 %v1200
        %v1460 = vunpack.c.h.b16 %v1200
        %v1461 = vunpack.c.l.b16 %v1201
        %v1462 = vunpack.c.h.b16 %v1201
        %v1463 = vunpack.c.l.b16 %v1202
        %v1464 = vunpack.c.h.b16 %v1202
        %v1465 = vunpack.c.l.b16 %v1203
        %v1466 = vunpack.c.h.b16 %v1203
        %v1467 = vunpack.c.l.b16 %v1204
        %v1468 = vunpack.c.h.b16 %v1204
        %v1469 = vunpack.c.l.b16 %v1205
        %v1470 = vunpack.c.h.b16 %v1205
        %v1471 = vunpack.c.l.b16 %v1206
        %v1472 = vunpack.c.h.b16 %v1206
        %v1473 = vunpack.c.l.b16 %v1207
        %v1474 = vunpack.c.h.b16 %v1207
        %v1475 = vunpack.c.l.b16 %v1208
        %v1476 = vunpack.c.h.b16 %v1208
        %v1477 = vunpack.c.l.b16 %v1209
        %v1478 = vunpack.c.h.b16 %v1209
        %v1479 = vunpack.c.l.b16 %v1210
        %v1480 = vunpack.c.h.b16 %v1210
        %v1481 = vunpack.c.l.b16 %v1211
        %v1482 = vunpack.c.h.b16 %v1211
        %v1483 = vunpack.c.l.b16 %v1212
        %v1484 = vunpack.c.h.b16 %v1212
        %v1485 = vunpack.c.l.b16 %v1213
        %v1486 = vunpack.c.h.b16 %v1213
        %v1487 = vunpack.c.l.b16 %v1214
        %v1488 = vunpack.c.h.b16 %v1214
        %v1489 = vunpack.c.l.b16 %v1215
        %v1490 = vunpack.c.h.b16 %v1215
        %v1491 = vunpack.c.l.b16 %v1216
        %v1492 = vunpack.c.h.b16 %v1216
        %v1493 = vunpack.c.l.b16 %v1217
        %v1494 = vunpack.c.h.b16 %v1217
        %v1495 = vunpack.c.l.b16 %v1218
        %v1496 = vunpack.c.h.b16 %v1218
        %v1497 = vunpack.c.l.b16 %v1219
        %v1498 = vunpack.c.h.b16 %v1219
        %v1499 = vunpack.c.l.b16 %v1220
        %v1500 = vunpack.c.h.b16 %v1220
        %v1501 = vunpack.c.l.b16 %v1221
        %v1502 = vunpack.c.h.b16 %v1221
        %v1503 = vunpack.c.l.b16 %v1222
        %v1504 = vunpack.c.h.b16 %v1222
        %v1505 = vunpack.c.l.b16 %v1223
        %v1506 = vunpack.c.h.b16 %v1223
        %v1507 = vunpack.c.l.b16 %v1224
        %v1508 = vunpack.c.h.b16 %v1224
        %v1509 = vunpack.c.l.b16 %v1225
        %v1510 = vunpack.c.h.b16 %v1225
        %v1511 = vunpack.c.l.b16 %v1226
        %v1512 = vunpack.c.h.b16 %v1226
        %v1513 = vunpack.c.l.b16 %v1227
        %v1514 = vunpack.c.h.b16 %v1227
        %v1515 = vunpack.c.l.b16 %v1228
        %v1516 = vunpack.c.h.b16 %v1228
        %v1517 = vunpack.c.l.b16 %v1229
        %v1518 = vunpack.c.h.b16 %v1229
        %v1519 = vunpack.c.l.b16 %v1230
        %v1520 = vunpack.c.h.b16 %v1230
        %v1521 = vunpack.c.l.b16 %v1231
        %v1522 = vunpack.c.h.b16 %v1231
        %v1523 = vunpack.c.l.b16 %v1232
        %v1524 = vunpack.c.h.b16 %v1232
        %v1525 = vunpack.c.l.b16 %v1233
        %v1526 = vunpack.c.h.b16 %v1233
        %v1527 = vunpack.c.l.b16 %v1234
        %v1528 = vunpack.c.h.b16 %v1234
        %v1529 = vunpack.c.l.b16 %v1235
        %v1530 = vunpack.c.h.b16 %v1235
        %v1531 = vunpack.c.l.b16 %v1236
        %v1532 = vunpack.c.h.b16 %v1236
        %v1533 = vunpack.c.l.b16 %v1237
        %v1534 = vunpack.c.h.b16 %v1237
        %v1535 = vunpack.c.l.b16 %v1238
        %v1536 = vunpack.c.h.b16 %v1238
        %v1537 = vpack.c.b16 %v1349, %v1345
        %v1538 = vpack.c.b16 %v1350, %v1346
        %v1539 = vpack.c.b16 %v1351, %v1347
        %v1540 = vpack.c.b16 %v1352, %v1348
        %v1541 = vpack.c.b16 %v1357, %v1353
        %v1542 = vpack.c.b16 %v1358, %v1354
        %v1543 = vpack.c.b16 %v1359, %v1355
        %v1544 = vpack.c.b16 %v1360, %v1356
        %v1545 = vpack.c.b16 %v1365, %v1361
        %v1546 = vpack.c.b16 %v1366, %v1362
        %v1547 = vpack.c.b16 %v1367, %v1363
        %v1548 = vpack.c.b16 %v1368, %v1364
        %v1549 = vpack.c.b16 %v1373, %v1369
        %v1550 = vpack.c.b16 %v1374, %v1370
        %v1551 = vpack.c.b16 %v1375, %v1371
        %v1552 = vpack.c.b16 %v1376, %v1372
        %v1553 = vpack.c.b16 %v1381, %v1377
        %v1554 = vpack.c.b16 %v1382, %v1378
        %v1555 = vpack.c.b16 %v1383, %v1379
        %v1556 = vpack.c.b16 %v1384, %v1380
        %v1557 = vpack.c.b16 %v1389, %v1385
        %v1558 = vpack.c.b16 %v1390, %v1386
        %v1559 = vpack.c.b16 %v1391, %v1387
        %v1560 = vpack.c.b16 %v1392, %v1388
        %v1561 = vpack.c.b16 %v1397, %v1393
        %v1562 = vpack.c.b16 %v1398, %v1394
        %v1563 = vpack.c.b16 %v1399, %v1395
        %v1564 = vpack.c.b16 %v1400, %v1396
        %v1565 = vpack.c.b16 %v1405, %v1401
        %v1566 = vpack.c.b16 %v1406, %v1402
        %v1567 = vpack.c.b16 %v1407, %v1403
        %v1568 = vpack.c.b16 %v1408, %v1404
        %v1569 = vpack.c.b16 %v1413, %v1409
        %v1570 = vpack.c.b16 %v1414, %v1410
        %v1571 = vpack.c.b16 %v1415, %v1411
        %v1572 = vpack.c.b16 %v1416, %v1412
        %v1573 = vpack.c.b16 %v1421, %v1417
        %v1574 = vpack.c.b16 %v1422, %v1418
        %v1575 = vpack.c.b16 %v1423, %v1419
        %v1576 = vpack.c.b16 %v1424, %v1420
        %v1577 = vpack.c.b16 %v1429, %v1425
        %v1578 = vpack.c.b16 %v1430, %v1426
        %v1579 = vpack.c.b16 %v1431, %v1427
        %v1580 = vpack.c.b16 %v1432, %v1428
        %v1581 = vpack.c.b16 %v1437, %v1433
        %v1582 = vpack.c.b16 %v1438, %v1434
        %v1583 = vpack.c.b16 %v1439, %v1435
        %v1584 = vpack.c.b16 %v1440, %v1436
        %v1585 = vpack.c.b16 %v1445, %v1441
        %v1586 = vpack.c.b16 %v1446, %v1442
        %v1587 = vpack.c.b16 %v1447, %v1443
        %v1588 = vpack.c.b16 %v1448, %v1444
        %v1589 = vpack.c.b16 %v1453, %v1449
        %v1590 = vpack.c.b16 %v1454, %v1450
        %v1591 = vpack.c.b16 %v1455, %v1451
        %v1592 = vpack.c.b16 %v1456, %v1452
        %v1593 = vpack.c.b16 %v1461, %v1457
        %v1594 = vpack.c.b16 %v1462, %v1458
        %v1595 = vpack.c.b16 %v1463, %v1459
        %v1596 = vpack.c.b16 %v1464, %v1460
        %v1597 = vpack.c.b16 %v1469, %v1465
        %v1598 = vpack.c.b16 %v1470, %v1466
        %v1599 = vpack.c.b16 %v1471, %v1467
        %v1600 = vpack.c.b16 %v1472, %v1468
        %v1601 = vpack.c.b16 %v1477, %v1473
        %v1602 = vpack.c.b16 %v1478, %v1474
        %v1603 = vpack.c.b16 %v1479, %v1475
        %v1604 = vpack.c.b16 %v1480, %v1476
        %v1605 = vpack.c.b16 %v1485, %v1481
        %v1606 = vpack.c.b16 %v1486, %v1482
        %v1607 = vpack.c.b16 %v1487, %v1483
        %v1608 = vpack.c.b16 %v1488, %v1484
        %v1609 = vpack.c.b16 %v1493, %v1489
        %v1610 = vpack.c.b16 %v1494, %v1490
        %v1611 = vpack.c.b16 %v1495, %v1491
        %v1612 = vpack.c.b16 %v1496, %v1492
        %v1613 = vpack.c.b16 %v1501, %v1497
        %v1614 = vpack.c.b16 %v1502, %v1498
        %v1615 = vpack.c.b16 %v1503, %v1499
        %v1616 = vpack.c.b16 %v1504, %v1500
        %v1617 = vpack.c.b16 %v1509, %v1505
        %v1618 = vpack.c.b16 %v1510, %v1506
        %v1619 = vpack.c.b16 %v1511, %v1507
        %v1620 = vpack.c.b16 %v1512, %v1508
        %v1621 = vpack.c.b16 %v1517, %v1513
        %v1622 = vpack.c.b16 %v1518, %v1514
        %v1623 = vpack.c.b16 %v1519, %v1515
        %v1624 = vpack.c.b16 %v1520, %v1516
        %v1625 = vpack.c.b16 %v1525, %v1521
        %v1626 = vpack.c.b16 %v1526, %v1522
        %v1627 = vpack.c.b16 %v1527, %v1523
        %v1628 = vpack.c.b16 %v1528, %v1524
        %v1629 = vpack.c.b16 %v1533, %v1529
        %v1630 = vpack.c.b16 %v1534, %v1530
        %v1631 = vpack.c.b16 %v1535, %v1531
        %v1632 = vpack.c.b16 %v1536, %v1532
        %1729 = vmatpush.bf16.msra.mxu0 %v1565
        %1730 = vmatpush.bf16.msra.mxu0 %v1561
        %1731 = vmatpush.bf16.msra.mxu0 %v1557
        %1732 = vmatpush.bf16.msra.mxu0 %v1553
        %1733 = vmatpush.bf16.msra.mxu0 %v1549
        %1734 = vmatpush.bf16.msra.mxu0 %v1545
        %1735 = vmatpush.bf16.msra.mxu0 %v1541
        %1736 = vmatpush.bf16.msra.mxu0 %v1537
        %1737 = vmatmul.bf16.gmra.mxu0 %v1140
        %v1738 = vpop.f32.mrf.mxu0
        %v1739 = vadd.f32 %v1241, %v1738
        %v1740 = vpop.f32.mrf.mxu0
        %1741 = vdwg.mxu0
        %1742 = vmatpush.bf16.msra.mxu0 %v1597
        %1743 = vmatpush.bf16.msra.mxu0 %v1593
        %1744 = vmatpush.bf16.msra.mxu0 %v1589
        %1745 = vmatpush.bf16.msra.mxu0 %v1585
        %1746 = vmatpush.bf16.msra.mxu0 %v1581
        %1747 = vmatpush.bf16.msra.mxu0 %v1577
        %1748 = vmatpush.bf16.msra.mxu0 %v1573
        %1749 = vmatpush.bf16.msra.mxu0 %v1569
        %1750 = vmatmul.bf16.gmra.mxu0 %v1141
        %v1751 = vpop.f32.mrf.mxu0
        %v1752 = vadd.f32 %v1739, %v1751
        %v1753 = vpop.f32.mrf.mxu0
        %1754 = vdwg.mxu0
        %1755 = vmatpush.bf16.msra.mxu0 %v1629
        %1756 = vmatpush.bf16.msra.mxu0 %v1625
        %1757 = vmatpush.bf16.msra.mxu0 %v1621
        %1758 = vmatpush.bf16.msra.mxu0 %v1617
        %1759 = vmatpush.bf16.msra.mxu0 %v1613
        %1760 = vmatpush.bf16.msra.mxu0 %v1609
        %1761 = vmatpush.bf16.msra.mxu0 %v1605
        %1762 = vmatpush.bf16.msra.mxu0 %v1601
        %1763 = vmatmul.bf16.gmra.mxu0 %v1142
        %v1764 = vpop.f32.mrf.mxu0
        %v1765 = vadd.f32 %v1752, %v1764
        %v1766 = vpop.f32.mrf.mxu0
        %1767 = vdwg.mxu0
        %1768 = vmatpush.bf16.msra.mxu0 %v1566
        %1769 = vmatpush.bf16.msra.mxu0 %v1562
        %1770 = vmatpush.bf16.msra.mxu0 %v1558
        %1771 = vmatpush.bf16.msra.mxu0 %v1554
        %1772 = vmatpush.bf16.msra.mxu0 %v1550
        %1773 = vmatpush.bf16.msra.mxu0 %v1546
        %1774 = vmatpush.bf16.msra.mxu0 %v1542
        %1775 = vmatpush.bf16.msra.mxu0 %v1538
        %1776 = vmatmul.bf16.gmra.mxu0 %v1140
        %v1777 = vpop.f32.mrf.mxu0
        %v1778 = vadd.f32 %v1242, %v1777
        %v1779 = vpop.f32.mrf.mxu0
        %1780 = vdwg.mxu0
        %1781 = vmatpush.bf16.msra.mxu0 %v1598
        %1782 = vmatpush.bf16.msra.mxu0 %v1594
        %1783 = vmatpush.bf16.msra.mxu0 %v1590
        %1784 = vmatpush.bf16.msra.mxu0 %v1586
        %1785 = vmatpush.bf16.msra.mxu0 %v1582
        %1786 = vmatpush.bf16.msra.mxu0 %v1578
        %1787 = vmatpush.bf16.msra.mxu0 %v1574
        %1788 = vmatpush.bf16.msra.mxu0 %v1570
        %1789 = vmatmul.bf16.gmra.mxu0 %v1141
        %v1790 = vpop.f32.mrf.mxu0
        %v1791 = vadd.f32 %v1778, %v1790
        %v1792 = vpop.f32.mrf.mxu0
        %1793 = vdwg.mxu0
        %1794 = vmatpush.bf16.msra.mxu0 %v1630
        %1795 = vmatpush.bf16.msra.mxu0 %v1626
        %1796 = vmatpush.bf16.msra.mxu0 %v1622
        %1797 = vmatpush.bf16.msra.mxu0 %v1618
        %1798 = vmatpush.bf16.msra.mxu0 %v1614
        %1799 = vmatpush.bf16.msra.mxu0 %v1610
        %1800 = vmatpush.bf16.msra.mxu0 %v1606
        %1801 = vmatpush.bf16.msra.mxu0 %v1602
        %1802 = vmatmul.bf16.gmra.mxu0 %v1142
        %v1803 = vpop.f32.mrf.mxu0
        %v1804 = vadd.f32 %v1791, %v1803
        %v1805 = vpop.f32.mrf.mxu0
        %1806 = vdwg.mxu0
        %1807 = vmatpush.bf16.msra.mxu0 %v1567
        %1808 = vmatpush.bf16.msra.mxu0 %v1563
        %1809 = vmatpush.bf16.msra.mxu0 %v1559
        %1810 = vmatpush.bf16.msra.mxu0 %v1555
        %1811 = vmatpush.bf16.msra.mxu0 %v1551
        %1812 = vmatpush.bf16.msra.mxu0 %v1547
        %1813 = vmatpush.bf16.msra.mxu0 %v1543
        %1814 = vmatpush.bf16.msra.mxu0 %v1539
        %1815 = vmatmul.bf16.gmra.mxu0 %v1140
        %v1816 = vpop.f32.mrf.mxu0
        %v1817 = vadd.f32 %v1243, %v1816
        %v1818 = vpop.f32.mrf.mxu0
        %1819 = vdwg.mxu0
        %1820 = vmatpush.bf16.msra.mxu0 %v1599
        %1821 = vmatpush.bf16.msra.mxu0 %v1595
        %1822 = vmatpush.bf16.msra.mxu0 %v1591
        %1823 = vmatpush.bf16.msra.mxu0 %v1587
        %1824 = vmatpush.bf16.msra.mxu0 %v1583
        %1825 = vmatpush.bf16.msra.mxu0 %v1579
        %1826 = vmatpush.bf16.msra.mxu0 %v1575
        %1827 = vmatpush.bf16.msra.mxu0 %v1571
        %1828 = vmatmul.bf16.gmra.mxu0 %v1141
        %v1829 = vpop.f32.mrf.mxu0
        %v1830 = vadd.f32 %v1817, %v1829
        %v1831 = vpop.f32.mrf.mxu0
        %1832 = vdwg.mxu0
        %1833 = vmatpush.bf16.msra.mxu0 %v1631
        %1834 = vmatpush.bf16.msra.mxu0 %v1627
        %1835 = vmatpush.bf16.msra.mxu0 %v1623
        %1836 = vmatpush.bf16.msra.mxu0 %v1619
        %1837 = vmatpush.bf16.msra.mxu0 %v1615
        %1838 = vmatpush.bf16.msra.mxu0 %v1611
        %1839 = vmatpush.bf16.msra.mxu0 %v1607
        %1840 = vmatpush.bf16.msra.mxu0 %v1603
        %1841 = vmatmul.bf16.gmra.mxu0 %v1142
        %v1842 = vpop.f32.mrf.mxu0
        %v1843 = vadd.f32 %v1830, %v1842
        %v1844 = vpop.f32.mrf.mxu0
        %1845 = vdwg.mxu0
        %1846 = vmatpush.bf16.msra.mxu0 %v1568
        %1847 = vmatpush.bf16.msra.mxu0 %v1564
        %1848 = vmatpush.bf16.msra.mxu0 %v1560
        %1849 = vmatpush.bf16.msra.mxu0 %v1556
        %1850 = vmatpush.bf16.msra.mxu0 %v1552
        %1851 = vmatpush.bf16.msra.mxu0 %v1548
        %1852 = vmatpush.bf16.msra.mxu0 %v1544
        %1853 = vmatpush.bf16.msra.mxu0 %v1540
        %1854 = vmatmul.bf16.gmra.mxu0 %v1140
        %v1855 = vpop.f32.mrf.mxu0
        %v1856 = vadd.f32 %v1244, %v1855
        %v1857 = vpop.f32.mrf.mxu0
        %1858 = vdwg.mxu0
        %1859 = vmatpush.bf16.msra.mxu0 %v1600
        %1860 = vmatpush.bf16.msra.mxu0 %v1596
        %1861 = vmatpush.bf16.msra.mxu0 %v1592
        %1862 = vmatpush.bf16.msra.mxu0 %v1588
        %1863 = vmatpush.bf16.msra.mxu0 %v1584
        %1864 = vmatpush.bf16.msra.mxu0 %v1580
        %1865 = vmatpush.bf16.msra.mxu0 %v1576
        %1866 = vmatpush.bf16.msra.mxu0 %v1572
        %1867 = vmatmul.bf16.gmra.mxu0 %v1141
        %v1868 = vpop.f32.mrf.mxu0
        %v1869 = vadd.f32 %v1856, %v1868
        %v1870 = vpop.f32.mrf.mxu0
        %1871 = vdwg.mxu0
        %1872 = vmatpush.bf16.msra.mxu0 %v1632
        %1873 = vmatpush.bf16.msra.mxu0 %v1628
        %1874 = vmatpush.bf16.msra.mxu0 %v1624
        %1875 = vmatpush.bf16.msra.mxu0 %v1620
        %1876 = vmatpush.bf16.msra.mxu0 %v1616
        %1877 = vmatpush.bf16.msra.mxu0 %v1612
        %1878 = vmatpush.bf16.msra.mxu0 %v1608
        %1879 = vmatpush.bf16.msra.mxu0 %v1604
        %1880 = vmatmul.bf16.gmra.mxu0 %v1142
        %v1881 = vpop.f32.mrf.mxu0
        %v1882 = vadd.f32 %v1869, %v1881
        %v1883 = vpop.f32.mrf.mxu0
        %1884 = vdwg.mxu0
        %v1885 = vtanh.pop %v1765
        %v1886 = vtanh.pop %v1804
        %v1887 = vtanh.pop %v1843
        %v1888 = vtanh.pop %v1882
        %v1889 = vpack.c.bf16 %v1885, %v1885
        %v1890 = vpack.c.bf16 %v1886, %v1886
        %v1891 = vpack.c.bf16 %v1887, %v1887
        %v1892 = vpack.c.bf16 %v1888, %v1888
        %v1893 = vld [vmem:[#allocation13] sm:$0xf]
        %v1894 = vld [vmem:[#allocation13 + $0x4] sm:$0xf]
        %v1895 = vld [vmem:[#allocation13 + $0x8] sm:$0xf]
        %v1896 = vld [vmem:[#allocation13 + $0xc] sm:$0xf]
        %v1897 = vld [vmem:[#allocation13 + $0x10] sm:$0xf]
        %v1898 = vld [vmem:[#allocation13 + $0x14] sm:$0xf]
        %v1899 = vld [vmem:[#allocation13 + $0x18] sm:$0xf]
        %v1900 = vld [vmem:[#allocation13 + $0x1c] sm:$0xf]
        %v1901 = vld [vmem:[#allocation13 + $0x20] sm:$0xf]
        %v1902 = vld [vmem:[#allocation13 + $0x24] sm:$0xf]
        %v1903 = vld [vmem:[#allocation13 + $0x28] sm:$0xf]
        %v1904 = vld [vmem:[#allocation13 + $0x2c] sm:$0xf]
        %v1905 = vld [vmem:[#allocation13 + $0x30] sm:$0xf]
        %v1906 = vld [vmem:[#allocation13 + $0x34] sm:$0xf]
        %v1907 = vld [vmem:[#allocation13 + $0x38] sm:$0xf]
        %v1908 = vld [vmem:[#allocation13 + $0x3c] sm:$0xf]
        %v1909 = vld [vmem:[#allocation13 + $0x40] sm:$0xf]
        %v1910 = vld [vmem:[#allocation13 + $0x44] sm:$0xf]
        %v1911 = vld [vmem:[#allocation13 + $0x48] sm:$0xf]
        %v1912 = vld [vmem:[#allocation13 + $0x4c] sm:$0xf]
        %v1913 = vld [vmem:[#allocation13 + $0x50] sm:$0xf]
        %v1914 = vld [vmem:[#allocation13 + $0x54] sm:$0xf]
        %v1915 = vld [vmem:[#allocation13 + $0x58] sm:$0xf]
        %v1916 = vld [vmem:[#allocation13 + $0x5c] sm:$0xf]
        %v1917 = vld [vmem:[#allocation13 + $0x60] sm:$0xf]
        %v1918 = vld [vmem:[#allocation13 + $0x64] sm:$0xf]
        %v1919 = vld [vmem:[#allocation13 + $0x68] sm:$0xf]
        %v1920 = vld [vmem:[#allocation13 + $0x6c] sm:$0xf]
        %v1921 = vld [vmem:[#allocation13 + $0x70] sm:$0xf]
        %v1922 = vld [vmem:[#allocation13 + $0x74] sm:$0xf]
        %v1923 = vld [vmem:[#allocation13 + $0x78] sm:$0xf]
        %v1924 = vld [vmem:[#allocation13 + $0x7c] sm:$0xf]
        %v1925 = vld [vmem:[#allocation13 + $0x80] sm:$0xf]
        %v1926 = vld [vmem:[#allocation13 + $0x84] sm:$0xf]
        %v1927 = vld [vmem:[#allocation13 + $0x88] sm:$0xf]
        %v1928 = vld [vmem:[#allocation13 + $0x8c] sm:$0xf]
        %v1929 = vld [vmem:[#allocation13 + $0x90] sm:$0xf]
        %v1930 = vld [vmem:[#allocation13 + $0x94] sm:$0xf]
        %v1931 = vld [vmem:[#allocation13 + $0x98] sm:$0xf]
        %v1932 = vld [vmem:[#allocation13 + $0x9c] sm:$0xf]
        %v1933 = vld [vmem:[#allocation13 + $0xa0] sm:$0xf]
        %v1934 = vld [vmem:[#allocation13 + $0xa4] sm:$0xf]
        %v1935 = vld [vmem:[#allocation13 + $0xa8] sm:$0xf]
        %v1936 = vld [vmem:[#allocation13 + $0xac] sm:$0xf]
        %v1937 = vld [vmem:[#allocation13 + $0xb0] sm:$0xf]
        %v1938 = vld [vmem:[#allocation13 + $0xb4] sm:$0xf]
        %v1939 = vld [vmem:[#allocation13 + $0xb8] sm:$0xf]
        %v1940 = vld [vmem:[#allocation13 + $0xbc] sm:$0xf]
        %v1941 = vld [vmem:[#allocation13 + $0xc0] sm:$0xf]
        %v1942 = vld [vmem:[#allocation13 + $0xc4] sm:$0xf]
        %v1943 = vld [vmem:[#allocation13 + $0xc8] sm:$0xf]
        %v1944 = vld [vmem:[#allocation13 + $0xcc] sm:$0xf]
        %v1945 = vld [vmem:[#allocation13 + $0xd0] sm:$0xf]
        %v1946 = vld [vmem:[#allocation13 + $0xd4] sm:$0xf]
        %v1947 = vld [vmem:[#allocation13 + $0xd8] sm:$0xf]
        %v1948 = vld [vmem:[#allocation13 + $0xdc] sm:$0xf]
        %v1949 = vld [vmem:[#allocation13 + $0xe0] sm:$0xf]
        %v1950 = vld [vmem:[#allocation13 + $0xe4] sm:$0xf]
        %v1951 = vld [vmem:[#allocation13 + $0xe8] sm:$0xf]
        %v1952 = vld [vmem:[#allocation13 + $0xec] sm:$0xf]
        %v1953 = vld [vmem:[#allocation13 + $0xf0] sm:$0xf]
        %v1954 = vld [vmem:[#allocation13 + $0xf4] sm:$0xf]
        %v1955 = vld [vmem:[#allocation13 + $0xf8] sm:$0xf]
        %v1956 = vld [vmem:[#allocation13 + $0xfc] sm:$0xf]
        %v1957 = vld [vmem:[%s8] sm:$0x1]
        %v1959 = vperm.slane %v1957, 0
        %v2025 = vunpack.c.l.b16 %v1893
        %v2026 = vunpack.c.l.b16 %v1894
        %v2027 = vunpack.c.l.b16 %v1895
        %v2028 = vunpack.c.l.b16 %v1896
        %v2029 = vunpack.c.l.b16 %v1897
        %v2030 = vunpack.c.l.b16 %v1898
        %v2031 = vunpack.c.l.b16 %v1899
        %v2032 = vunpack.c.l.b16 %v1900
        %v2033 = vunpack.c.l.b16 %v1901
        %v2034 = vunpack.c.l.b16 %v1902
        %v2035 = vunpack.c.l.b16 %v1903
        %v2036 = vunpack.c.l.b16 %v1904
        %v2037 = vunpack.c.l.b16 %v1905
        %v2038 = vunpack.c.l.b16 %v1906
        %v2039 = vunpack.c.l.b16 %v1907
        %v2040 = vunpack.c.l.b16 %v1908
        %v2041 = vunpack.c.l.b16 %v1909
        %v2042 = vunpack.c.l.b16 %v1910
        %v2043 = vunpack.c.l.b16 %v1911
        %v2044 = vunpack.c.l.b16 %v1912
        %v2045 = vunpack.c.l.b16 %v1913
        %v2046 = vunpack.c.l.b16 %v1914
        %v2047 = vunpack.c.l.b16 %v1915
        %v2048 = vunpack.c.l.b16 %v1916
        %v2049 = vunpack.c.l.b16 %v1917
        %v2050 = vunpack.c.l.b16 %v1918
        %v2051 = vunpack.c.l.b16 %v1919
        %v2052 = vunpack.c.l.b16 %v1920
        %v2053 = vunpack.c.l.b16 %v1921
        %v2054 = vunpack.c.l.b16 %v1922
        %v2055 = vunpack.c.l.b16 %v1923
        %v2056 = vunpack.c.l.b16 %v1924
        %v2057 = vunpack.c.l.b16 %v1925
        %v2058 = vunpack.c.l.b16 %v1926
        %v2059 = vunpack.c.l.b16 %v1927
        %v2060 = vunpack.c.l.b16 %v1928
        %v2061 = vunpack.c.l.b16 %v1929
        %v2062 = vunpack.c.l.b16 %v1930
        %v2063 = vunpack.c.l.b16 %v1931
        %v2064 = vunpack.c.l.b16 %v1932
        %v2065 = vunpack.c.l.b16 %v1933
        %v2066 = vunpack.c.l.b16 %v1934
        %v2067 = vunpack.c.l.b16 %v1935
        %v2068 = vunpack.c.l.b16 %v1936
        %v2069 = vunpack.c.l.b16 %v1937
        %v2070 = vunpack.c.l.b16 %v1938
        %v2071 = vunpack.c.l.b16 %v1939
        %v2072 = vunpack.c.l.b16 %v1940
        %v2073 = vunpack.c.l.b16 %v1941
        %v2074 = vunpack.c.l.b16 %v1942
        %v2075 = vunpack.c.l.b16 %v1943
        %v2076 = vunpack.c.l.b16 %v1944
        %v2077 = vunpack.c.l.b16 %v1945
        %v2078 = vunpack.c.l.b16 %v1946
        %v2079 = vunpack.c.l.b16 %v1947
        %v2080 = vunpack.c.l.b16 %v1948
        %v2081 = vunpack.c.l.b16 %v1949
        %v2082 = vunpack.c.l.b16 %v1950
        %v2083 = vunpack.c.l.b16 %v1951
        %v2084 = vunpack.c.l.b16 %v1952
        %v2085 = vunpack.c.l.b16 %v1953
        %v2086 = vunpack.c.l.b16 %v1954
        %v2087 = vunpack.c.l.b16 %v1955
        %v2088 = vunpack.c.l.b16 %v1956
        %v2089 = vpack.c.b16 %v2026, %v2025
        %v2090 = vpack.c.b16 %v2028, %v2027
        %v2091 = vpack.c.b16 %v2030, %v2029
        %v2092 = vpack.c.b16 %v2032, %v2031
        %v2093 = vpack.c.b16 %v2034, %v2033
        %v2094 = vpack.c.b16 %v2036, %v2035
        %v2095 = vpack.c.b16 %v2038, %v2037
        %v2096 = vpack.c.b16 %v2040, %v2039
        %v2097 = vpack.c.b16 %v2042, %v2041
        %v2098 = vpack.c.b16 %v2044, %v2043
        %v2099 = vpack.c.b16 %v2046, %v2045
        %v2100 = vpack.c.b16 %v2048, %v2047
        %v2101 = vpack.c.b16 %v2050, %v2049
        %v2102 = vpack.c.b16 %v2052, %v2051
        %v2103 = vpack.c.b16 %v2054, %v2053
        %v2104 = vpack.c.b16 %v2056, %v2055
        %v2105 = vpack.c.b16 %v2058, %v2057
        %v2106 = vpack.c.b16 %v2060, %v2059
        %v2107 = vpack.c.b16 %v2062, %v2061
        %v2108 = vpack.c.b16 %v2064, %v2063
        %v2109 = vpack.c.b16 %v2066, %v2065
        %v2110 = vpack.c.b16 %v2068, %v2067
        %v2111 = vpack.c.b16 %v2070, %v2069
        %v2112 = vpack.c.b16 %v2072, %v2071
        %v2113 = vpack.c.b16 %v2074, %v2073
        %v2114 = vpack.c.b16 %v2076, %v2075
        %v2115 = vpack.c.b16 %v2078, %v2077
        %v2116 = vpack.c.b16 %v2080, %v2079
        %v2117 = vpack.c.b16 %v2082, %v2081
        %v2118 = vpack.c.b16 %v2084, %v2083
        %v2119 = vpack.c.b16 %v2086, %v2085
        %v2120 = vpack.c.b16 %v2088, %v2087
        %2153 = vmatpush.bf16.msra.mxu0 %v2096
        %2154 = vmatpush.bf16.msra.mxu0 %v2095
        %2155 = vmatpush.bf16.msra.mxu0 %v2094
        %2156 = vmatpush.bf16.msra.mxu0 %v2093
        %2157 = vmatpush.bf16.msra.mxu0 %v2092
        %2158 = vmatpush.bf16.msra.mxu0 %v2091
        %2159 = vmatpush.bf16.msra.mxu0 %v2090
        %2160 = vmatpush.bf16.msra.mxu0 %v2089
        %2161 = vmatmul.bf16.gmra.mxu0 %v1889
        %v2162 = vpop.f32.mrf.mxu0
        %v2163 = vadd.f32 %v1959, %v2162
        %v2164 = vpop.f32.mrf.mxu0
        %2165 = vdwg.mxu0
        %2166 = vmatpush.bf16.msra.mxu0 %v2104
        %2167 = vmatpush.bf16.msra.mxu0 %v2103
        %2168 = vmatpush.bf16.msra.mxu0 %v2102
        %2169 = vmatpush.bf16.msra.mxu0 %v2101
        %2170 = vmatpush.bf16.msra.mxu0 %v2100
        %2171 = vmatpush.bf16.msra.mxu0 %v2099
        %2172 = vmatpush.bf16.msra.mxu0 %v2098
        %2173 = vmatpush.bf16.msra.mxu0 %v2097
        %2174 = vmatmul.bf16.gmra.mxu0 %v1890
        %v2175 = vpop.f32.mrf.mxu0
        %v2176 = vadd.f32 %v2163, %v2175
        %v2177 = vpop.f32.mrf.mxu0
        %2178 = vdwg.mxu0
        %2179 = vmatpush.bf16.msra.mxu0 %v2112
        %2180 = vmatpush.bf16.msra.mxu0 %v2111
        %2181 = vmatpush.bf16.msra.mxu0 %v2110
        %2182 = vmatpush.bf16.msra.mxu0 %v2109
        %2183 = vmatpush.bf16.msra.mxu0 %v2108
        %2184 = vmatpush.bf16.msra.mxu0 %v2107
        %2185 = vmatpush.bf16.msra.mxu0 %v2106
        %2186 = vmatpush.bf16.msra.mxu0 %v2105
        %2187 = vmatmul.bf16.gmra.mxu0 %v1891
        %v2188 = vpop.f32.mrf.mxu0
        %v2189 = vadd.f32 %v2176, %v2188
        %v2190 = vpop.f32.mrf.mxu0
        %2191 = vdwg.mxu0
        %2192 = vmatpush.bf16.msra.mxu0 %v2120
        %2193 = vmatpush.bf16.msra.mxu0 %v2119
        %2194 = vmatpush.bf16.msra.mxu0 %v2118
        %2195 = vmatpush.bf16.msra.mxu0 %v2117
        %2196 = vmatpush.bf16.msra.mxu0 %v2116
        %2197 = vmatpush.bf16.msra.mxu0 %v2115
        %2198 = vmatpush.bf16.msra.mxu0 %v2114
        %2199 = vmatpush.bf16.msra.mxu0 %v2113
        %2200 = vmatmul.bf16.gmra.mxu0 %v1892
        %v2201 = vpop.f32.mrf.mxu0
        %v2202 = vadd.f32 %v2189, %v2201
        %v2203 = vpop.f32.mrf.mxu0
        %2204 = vdwg.mxu0
        %v2205 = vpack.c.bf16 %v2202, %v2202
        %v2206 = vld [vmem:[#allocation14] sm:$0xf]
        %v2207 = vld [vmem:[#allocation14 + $0x4] sm:$0xf]
        %v2208 = vld [vmem:[#allocation14 + $0x8] sm:$0xf]
        %v2209 = vld [vmem:[#allocation14 + $0xc] sm:$0xf]
        %v2210 = vld [vmem:[#allocation14 + $0x10] sm:$0xf]
        %v2211 = vld [vmem:[#allocation14 + $0x14] sm:$0xf]
        %v2212 = vld [vmem:[#allocation14 + $0x18] sm:$0xf]
        %v2213 = vld [vmem:[#allocation14 + $0x1c] sm:$0xf]
        %v2214 = vld [vmem:[#allocation14 + $0x20] sm:$0xf]
        %v2215 = vld [vmem:[#allocation14 + $0x24] sm:$0xf]
        %v2216 = vld [vmem:[#allocation14 + $0x28] sm:$0xf]
        %v2217 = vld [vmem:[#allocation14 + $0x2c] sm:$0xf]
        %v2218 = vld [vmem:[#allocation14 + $0x30] sm:$0xf]
        %v2219 = vld [vmem:[#allocation14 + $0x34] sm:$0xf]
        %v2220 = vld [vmem:[#allocation14 + $0x38] sm:$0xf]
        %v2221 = vld [vmem:[#allocation14 + $0x3c] sm:$0xf]
        %v2222 = vld [vmem:[%s10] sm:$0x1]
        %v2224 = vperm.slane %v2222, 0
        %v2242 = vunpack.c.l.b16 %v2206
        %v2243 = vunpack.c.l.b16 %v2207
        %v2244 = vunpack.c.l.b16 %v2208
        %v2245 = vunpack.c.l.b16 %v2209
        %v2246 = vunpack.c.l.b16 %v2210
        %v2247 = vunpack.c.l.b16 %v2211
        %v2248 = vunpack.c.l.b16 %v2212
        %v2249 = vunpack.c.l.b16 %v2213
        %v2250 = vunpack.c.l.b16 %v2214
        %v2251 = vunpack.c.l.b16 %v2215
        %v2252 = vunpack.c.l.b16 %v2216
        %v2253 = vunpack.c.l.b16 %v2217
        %v2254 = vunpack.c.l.b16 %v2218
        %v2255 = vunpack.c.l.b16 %v2219
        %v2256 = vunpack.c.l.b16 %v2220
        %v2257 = vunpack.c.l.b16 %v2221
        %v2258 = vpack.c.b16 %v2243, %v2242
        %v2259 = vpack.c.b16 %v2245, %v2244
        %v2260 = vpack.c.b16 %v2247, %v2246
        %v2261 = vpack.c.b16 %v2249, %v2248
        %v2262 = vpack.c.b16 %v2251, %v2250
        %v2263 = vpack.c.b16 %v2253, %v2252
        %v2264 = vpack.c.b16 %v2255, %v2254
        %v2265 = vpack.c.b16 %v2257, %v2256
        %2274 = vmatpush.bf16.msra.mxu0 %v2265
        %2275 = vmatpush.bf16.msra.mxu0 %v2264
        %2276 = vmatpush.bf16.msra.mxu0 %v2263
        %2277 = vmatpush.bf16.msra.mxu0 %v2262
        %2278 = vmatpush.bf16.msra.mxu0 %v2261
        %2279 = vmatpush.bf16.msra.mxu0 %v2260
        %2280 = vmatpush.bf16.msra.mxu0 %v2259
        %2281 = vmatpush.bf16.msra.mxu0 %v2258
        %2282 = vmatmul.bf16.gmra.mxu0 %v2205
        %v2283 = vpop.f32.mrf.mxu0
        %v2284 = vadd.f32 %v2224, %v2283
        %v2285 = vpop.f32.mrf.mxu0
        %2286 = vdwg.mxu0
        %2287 = vst [vmem:[%s573] sm:$0xff] %v2202
        %2288 = vst [vmem:[%s580] sm:$0xff] %v2284
        %v2289 = vlaneseq
        %v2290 = vand.u32 %v2289, 127
        %vm2291 = vcmp.lt.s32.totalorder %v2290, 10
        %v2292 = vsel %vm2291, %v2284, -1e+30
        %2293 = vmax.xlane.f32.xlu0 %v2292
        %v2294 = vpop.xlane.xlu0 %2293
        %v2295 = vsub.f32 %v2292, %v2294
        %v2296 = vmul.f32 %v2295, 1.442695
        %v2297 = vpow.pop %v2296
        %v2298 = vsel %vm2291, %v2297, 0.0
        %2299 = vadd.xlane.f32.xlu0 %v2298
        %v2300 = vpop.xlane.xlu0 %2299
        %v2301 = vrcp.pop %v2300
        %v2302 = vmul.f32 %v2300, %v2301
        %v2303 = vsub.f32 1.0, %v2302
        %v2304 = vmul.f32 %v2301, %v2303
        %v2305 = vadd.f32 %v2301, %v2304
        %vm2306 = vweird.f32 %v2300
        %vm2307 = vweird.f32 %v2301
        %vm2308 = vmor %vm2306, %vm2307
        %v2309 = vsel %vm2308, %v2301, %v2305
        %v2310 = vand.u32 2147483647, %v2300
        %vm2311 = vcmp.eq.f32.partialorder %v2310, 8.507059e+37
        %v2312 = vand.u32 %v2300, 2147483648
        %v2313 = vor.u32 1.1754944e-38, %v2312
        %v2314 = vsel %vm2311, %v2313, %v2309
        %v2315 = vmul.f32 %v2298, %v2314
        %2316 = vst [vmem:[%s587] sm:$0xff] %v2315
        %s2317 = sand.u32 %s282, 1
        %s2318 = scalar_lea.sflag [#allocation4], %s2317
        %s2319 = sand.u32 %s282, 1
        %s2320 = smul.addr %s2319, 8
        %s2321 = scalar_lea.vmem [#allocation16], %s2320
        %s2322 = sand.u32 %s38, 1
        %s2323 = scalar_lea.sflag [#allocation18], %s2322
        %s2324 = sand.u32 %s308, 1
        %s2325 = smul.addr %s2324, 8
        %s2326 = scalar_lea.vmem [#allocation17], %s2325
        %s2327 = sand.u32 %s38, 1
        %s2328 = scalar_lea.sflag [#allocation18], %s2327
        %s2329 = sand.u32 %s334, 1
        %s2330 = smul.addr %s2329, 8
        %s2331 = scalar_lea.vmem [#allocation19], %s2330
        // Predicated region
        $region97: #{tpu_custom_call.1} parent=63 // pred_check
          %p2332 = pneg %p292
        $region98: #{tpu_custom_call.1} parent=63 // pred_check_branch
          %2334 = sbr.rel (%p2332) target = $region100
        $region99: #{tpu_custom_call.1} parent=63 // pred_region
          %2336 = vsyncadd %s2318, 0
          %s2337 = smul.addr %s38, 8
          %s2338 = scalar_lea.hbm %s11, %s2337
          %s2340 = sshll.u32 %s2321, 4
          %s2341 = int_to_ptr.vmem [resolvable:$true] %s2340
          %s2342 = sshll.u32 %s2338, 4
          %s2343 = int_to_ptr.hbm [resolvable:$true] %s2342
          %2345 = dma.vmem_to_hbm [thread:$0]  %s2341, 128, %s2343, %s2318
        $region100: #{tpu_custom_call.1} parent=63 // pred_fallthru
          _
        // Predicated region
        $region101: #{tpu_custom_call.1} parent=63 // pred_check
          %p2346 = pneg %p318
        $region102: #{tpu_custom_call.1} parent=63 // pred_check_branch
          %2348 = sbr.rel (%p2346) target = $region104
        $region103: #{tpu_custom_call.1} parent=63 // pred_region
          %2350 = vsyncadd %s2323, 0
          %s2351 = smul.addr %s38, 8
          %s2352 = scalar_lea.hbm %s12, %s2351
          %s2354 = sshll.u32 %s2326, 4
          %s2355 = int_to_ptr.vmem [resolvable:$true] %s2354
          %s2356 = sshll.u32 %s2352, 4
          %s2357 = int_to_ptr.hbm [resolvable:$true] %s2356
          %2359 = dma.vmem_to_hbm [thread:$0]  %s2355, 128, %s2357, %s2323
        $region104: #{tpu_custom_call.1} parent=63 // pred_fallthru
          _
        // Predicated region
        $region105: #{tpu_custom_call.1} parent=63 // pred_check
          %p2360 = pneg %p344
        $region106: #{tpu_custom_call.1} parent=63 // pred_check_branch
          %2362 = sbr.rel (%p2360) target = $region108
        $region107: #{tpu_custom_call.1} parent=63 // pred_region
          %2364 = vsyncadd %s2328, 0
          %s2365 = smul.addr %s38, 8
          %s2366 = scalar_lea.hbm %s13, %s2365
          %s2368 = sshll.u32 %s2331, 4
          %s2369 = int_to_ptr.vmem [resolvable:$true] %s2368
          %s2370 = sshll.u32 %s2366, 4
          %s2371 = int_to_ptr.hbm [resolvable:$true] %s2370
          %2373 = dma.vmem_to_hbm [thread:$0]  %s2369, 128, %s2371, %s2328
        $region108: #{tpu_custom_call.1} parent=63 // pred_fallthru
          _
      $region64: #{tpu_custom_call.1} parent=5 // pred_fallthru
        _
      %p2374 = scmp.le.s32.totalorder 2, %s33
      // Predicated region
      $region109: #{tpu_custom_call.1} parent=5 // pred_check
        %p2375 = pneg %p2374
      $region110: #{tpu_custom_call.1} parent=5 // pred_check_branch
        %2377 = sbr.rel (%p2375) target = $region112
      $region111: #{tpu_custom_call.1} parent=5 // pred_region
        %s2378 = ssub.s32 %s33, 2
        // Predicated region
        $region113: #{tpu_custom_call.1} parent=111 // pred_check
          %p2379 = pneg %p298
        $region114: #{tpu_custom_call.1} parent=111 // pred_check_branch
          %2381 = sbr.rel (%p2379) target = $region116
        $region115: #{tpu_custom_call.1} parent=111 // pred_region
          %s2382 = sand.u32 %s283, 1
          %s2383 = scalar_lea.sflag [#allocation4], %s2382
          %s2384 = sand.u32 %s283, 1
          %s2385 = smul.addr %s2384, 8
          %s2386 = scalar_lea.vmem [#allocation16], %s2385
          %2388 = dma.done %s2383, 128
        $region116: #{tpu_custom_call.1} parent=111 // pred_fallthru
          _
        // Predicated region
        $region117: #{tpu_custom_call.1} parent=111 // pred_check
          %p2389 = pneg %p324
        $region118: #{tpu_custom_call.1} parent=111 // pred_check_branch
          %2391 = sbr.rel (%p2389) target = $region120
        $region119: #{tpu_custom_call.1} parent=111 // pred_region
          %s2392 = sand.u32 %s39, 1
          %s2393 = scalar_lea.sflag [#allocation18], %s2392
          %s2394 = sand.u32 %s309, 1
          %s2395 = smul.addr %s2394, 8
          %s2396 = scalar_lea.vmem [#allocation17], %s2395
          %2398 = dma.done %s2393, 128
        $region120: #{tpu_custom_call.1} parent=111 // pred_fallthru
          _
        // Predicated region
        $region121: #{tpu_custom_call.1} parent=111 // pred_check
          %p2399 = pneg %p350
        $region122: #{tpu_custom_call.1} parent=111 // pred_check_branch
          %2401 = sbr.rel (%p2399) target = $region124
        $region123: #{tpu_custom_call.1} parent=111 // pred_region
          %s2402 = sand.u32 %s39, 1
          %s2403 = scalar_lea.sflag [#allocation18], %s2402
          %s2404 = sand.u32 %s335, 1
          %s2405 = smul.addr %s2404, 8
          %s2406 = scalar_lea.vmem [#allocation19], %s2405
          %2408 = dma.done %s2403, 128
        $region124: #{tpu_custom_call.1} parent=111 // pred_fallthru
          _
      $region112: #{tpu_custom_call.1} parent=5 // pred_fallthru
        _
    $region6: #{tpu_custom_call.1} parent=1 // loop_footer
      %s37 = sadd.s32 1, %s33
    $region7: #{tpu_custom_call.1} parent=1 // loop_footer_branch
      %32 = sbr.rel target = $region3
    $region8: #{tpu_custom_call.1} parent=1 // loop_exit
      _
    %2409 = vsyncpa [#allocation3], 1
    %s2410 = scalar_lea.sflag [#allocation3], 1
    %2411 = vsyncpa %s2410, 1
    %2412 = vsyncpa [#allocation6], 1
    %2413 = vsyncpa [#allocation9], 1
    %2414 = vsyncpa [#allocation12], 1
    %2415 = vsyncpa [#allocation15], 1
    %2416 = vsyncpa [#allocation4], 1
    %s2417 = scalar_lea.sflag [#allocation4], 1
    %2418 = vsyncpa %s2417, 1
    %2419 = vsyncpa [#allocation18], 1
    %s2420 = scalar_lea.sflag [#allocation18], 1
    %2421 = vsyncpa %s2420, 1

</llo_original>
